<compile_context>
chip_gen: v7x
topology: tpu7x:2x2x1
jax: 0.10.0
libtpu: 0.0.40
codegen_flags: <defaults>
</compile_context>

<pallas_src>
import jax
import jax.numpy as jnp
from jax.experimental import pallas as pl
from jax.experimental.pallas import tpu as pltpu

MODEL_PARAMS = dict(
    mode="unet", special_estimate=None, out_channels=8, scale_factor=0,
    block_depth=[0], use_connection=None, stride=[2, 2], padding_type="zeros",
    bias=True, embedding_mode="sigma", use_film=False, fu_kernel=1,
    ffc_conv_kernel=3, ffc_global_ratio_in=[0.5], ffc_global_ratio_out=[0.5],
    fft_norm="ortho", use_only_freq=True,
)
STFT_PARAMS = dict(n_fft=32, hop_length=8, win_length=32, return_complex=False,
                   center=True, window="hann_window")

_CONV_K = 7            # kernel size of the start / end convolutions in FFCSE
_HALO = _CONV_K // 2
_N_TAPS = 8            # 7 real temporal taps + 1 zero tap -> lane-dense 8*32 = 256


# ----------------------------- small helpers -----------------------------
def _round_up(x, m):
    return (x + m - 1) // m * m


def _pad_to(a, axis, size):
    pad = [(0, 0)] * a.ndim
    pad[axis] = (0, size - a.shape[axis])
    return jnp.pad(a, pad)


# ----------------------------- SigmaBlock (plain jnp) -----------------------------
def sigma_block(params, t):
    """SigmaBlock: RandomFourierFeatures + Linear/SiLU + Linear/SiLU.
    Kept in plain jnp: a dedicated Pallas call was pure launch overhead at M=B."""
    g = params["rff_gaussian"]                                 # (1, 64)
    ang = 2.0 * jnp.pi * jnp.log10(t)[:, None] * g             # (B, 64)
    emb = jnp.concatenate([jnp.cos(ang), jnp.sin(ang)], axis=1)  # (B, 128)
    h = emb @ params["proj1_w"].T + params["proj1_b"]
    h = h * jax.nn.sigmoid(h)                                  # silu
    o = h @ params["proj2_w"].T + params["proj2_b"]
    return o * jax.nn.sigmoid(o)                               # silu


# ----------------------------- constant matrices -----------------------------
def hann_window(win_length):
    # torch.hann_window(win_length, periodic=False) — per STFTConfig.get_window()
    n = jnp.arange(win_length, dtype=jnp.float32)
    return 0.5 * (1.0 - jnp.cos(2.0 * jnp.pi * n / (win_length - 1)))


def dft_matrices(n_fft, window):
    """Windowed onesided DFT (n_fft, 2F) and windowed inverse DFT (2F, n_fft)."""
    Fr = n_fft // 2 + 1
    n = jnp.arange(n_fft, dtype=jnp.float32)[:, None]
    f = jnp.arange(Fr, dtype=jnp.float32)[None, :]
    ang = 2.0 * jnp.pi * n * f / n_fft                                          # (n_fft, Fr)
    dft = window[:, None] * jnp.concatenate([jnp.cos(ang), -jnp.sin(ang)], axis=1)
    coef = jnp.where((jnp.arange(Fr) == 0) | (jnp.arange(Fr) == n_fft // 2), 1.0, 2.0)
    inv_re = coef[:, None] * jnp.cos(ang.T) / n_fft                              # (Fr, n_fft)
    inv_im = -coef[:, None] * jnp.sin(ang.T) / n_fft
    idft = jnp.concatenate([inv_re, inv_im], axis=0) * window[None, :]           # (2F, n_fft)
    return dft, idft


def conv_band_matrix(w, Fdim):
    """(Cout,Cin,K,K) conv weight -> (K*Cin*Fdim, Cout*Fdim) banded matrix so a
    same-padded 2D conv over a (T, F) map becomes K time-shifted matmuls."""
    Cout, Cin, KF, KT = w.shape
    f_in = jnp.arange(Fdim)[:, None]
    f_out = jnp.arange(Fdim)[None, :]
    a = f_in - f_out + KF // 2
    valid = (a >= 0) & (a < KF)
    a_c = jnp.clip(a, 0, KF - 1)
    wg = w[:, :, a_c, :]                                       # (Cout, Cin, F, F, KT)
    wg = jnp.where(valid[None, None, :, :, None], wg, 0.0)
    big = jnp.transpose(wg, (4, 1, 2, 0, 3))                   # (KT, Cin, F_in, Cout, F_out)
    return big.reshape(KT * Cin * Fdim, Cout * Fdim)


def ola_envelope(window, n_fft, hop, T):
    R = n_fft // hop
    wsq = (window ** 2).reshape(R, hop)
    env = jnp.zeros((T + R - 1, hop), jnp.float32)
    for a in range(R):
        env = env.at[a:a + T, :].add(wsq[a][None, :])
    return env.reshape(-1)                                     # (hop*(T-1) + n_fft,)


def _folded_weights(params, window, n_fft, Fr):
    """Fold the windowed DFT into the start conv and the windowed inverse DFT into the
    end conv.  Returns f32, unpadded:
      w1: (KT*n_fft, Cmid*Fr)   b1: (1, Cmid*Fr)
      w2: (KT, Cmid*Fr, n_fft)  b2: (1, n_fft)
    """
    KT = _CONV_K
    Cmid = MODEL_PARAMS["out_channels"]
    dft, idft = dft_matrices(n_fft, window)
    w1big = conv_band_matrix(params["start_w"], Fr).reshape(KT, 2 * Fr, Cmid * Fr)
    w1 = jnp.einsum("nc,kcj->knj", dft, w1big).reshape(KT * n_fft, Cmid * Fr)
    b1 = jnp.repeat(params["start_b"], Fr)[None, :]
    w2big = conv_band_matrix(params["end_w"], Fr).reshape(KT, Cmid * Fr, 2 * Fr)
    w2 = jnp.matmul(w2big, idft)                               # (KT, Cmid*Fr, n_fft)
    b2 = jnp.repeat(params["end_b"], Fr)[None, :] @ idft       # (1, n_fft)
    return w1, b1, w2, b2


# ----------------------------- framing / overlap-add -----------------------------
def _frames_from_signal(x, n_fft, hop):
    """torch.stft framing (center=True, reflect pad) via reshape + shifted concat."""
    B, _, L = x.shape
    assert n_fft % hop == 0 and L % hop == 0
    xs = x[:, 0, :]
    xpad = jnp.pad(xs, ((0, 0), (n_fft // 2, n_fft // 2)), mode="reflect")
    Lp = L + n_fft
    T = (Lp - n_fft) // hop + 1
    R = n_fft // hop
    xr = xpad.reshape(B, Lp // hop, hop)
    frames = jnp.concatenate([xr[:, a:a + T, :] for a in range(R)], axis=-1)    # (B, T, n_fft)
    return frames, T, Lp


def _overlap_add(frames_out, window, L, n_fft, hop):
    """torch.istft: overlap-add + window-envelope normalization + center crop."""
    B, T, _ = frames_out.shape
    R = n_fft // hop
    Lp = hop * (T - 1) + n_fft
    y = jnp.zeros((B, Lp // hop, hop), jnp.float32)
    for a in range(R):
        y = y.at[:, a:a + T, :].add(frames_out[:, :, a * hop:(a + 1) * hop])
    y = y.reshape(B, Lp)
    env = ola_envelope(window, n_fft, hop, T)   # strictly positive over the cropped region
    start = n_fft // 2
    return y[:, start:start + L] / env[start:start + L]


# ----------------------------- fused spectral Pallas kernel -----------------------------
def _make_spectral_kernel(BB, T, n_fft, rows_pad):
    """One grid step processes BB batch elements.
      fh_ref : (BB, T + _N_TAPS - 1, n_fft)  bf16  halo'd frames
      w1_ref : (_N_TAPS*n_fft, Np)           bf16  windowed-DFT o start-conv (tap-stacked K)
      b1_ref : (1, Np)                       f32
      w2_ref : (Np, _N_TAPS*n_fft)           bf16  end-conv o windowed-IDFT (tap-stacked N)
      y_ref  : (rows_pad, _N_TAPS*n_fft)     f32   lane-dense per-tap frame contributions
    """
    lanes = _N_TAPS * n_fft

    def kernel(fh_ref, w1_ref, b1_ref, w2_ref, y_ref):
        fh = fh_ref[...]                                       # (BB, TH, n_fft) bf16
        # Build the time-shift concat in VMEM (no 8x HBM duplication of the input).
        pieces = []
        for b in range(BB):
            fb = fh[b]                                         # (TH, n_fft)
            pieces.append(jnp.concatenate([fb[k:k + T, :] for k in range(_N_TAPS)], axis=-1))
        if rows_pad > BB * T:                                  # pad M to a multiple of 8
            pieces.append(jnp.zeros((rows_pad - BB * T, lanes), fh.dtype))
        fcat = jnp.concatenate(pieces, axis=0) if len(pieces) > 1 else pieces[0]
        # (windowed DFT + 7x7 start conv) as ONE K=256 matmul, f32 accumulation.
        mid = jnp.dot(fcat, w1_ref[...], preferred_element_type=jnp.float32) + b1_ref[...]
        # (7x7 end conv + windowed inverse DFT) as ONE lane-dense N=256 matmul against the
        # tap-stacked weight; the 7 shifted adds happen on the lane-dense slab outside.
        y_ref[...] = jnp.dot(mid.astype(jnp.bfloat16), w2_ref[...],
                             preferred_element_type=jnp.float32)

    return kernel


def _pick_batch_block(B, target=8):
    """Batch elements per grid step; keep >= 2 grid steps when possible so the
    'parallel' batch axis can be split across v7x's two TensorCores."""
    bb = min(B, target)
    if -(-B // bb) == 1 and bb > 1:
        bb = (bb + 1) // 2
    return bb


# ----------------------------- FFCSE forward -----------------------------
def ffcse_forward(params, x, t):
    n_fft = STFT_PARAMS["n_fft"]
    hop = STFT_PARAMS["hop_length"]
    Fr = n_fft // 2 + 1
    KT = _CONV_K
    Cmid = MODEL_PARAMS["out_channels"]
    B, _, L = x.shape

    window = hann_window(STFT_PARAMS["win_length"])
    frames, T, _ = _frames_from_signal(x, n_fft, hop)                 # (B, T, n_fft) f32
    w1, b1, w2, b2 = _folded_weights(params, window, n_fft, Fr)

    # ---- sigma conditioning (embedding_mode='sigma').  With block_depth=[0] the conv
    # stack has zero FFC blocks, so (exactly like the reference) the embedding is
    # computed-but-unused; skip the dead compute here.
    if sum(MODEL_PARAMS["block_depth"]) > 0:
        _ = sigma_block(params, t)  # TODO(synk): route into FFCResNetBlocks once block_depth > 0.

    # ---- pad / cast constant operands (lane dims -> multiples of 128, bf16 for MXU)
    Kp = _N_TAPS * n_fft                                              # 256
    Np = _round_up(Cmid * Fr, 128)                                    # 256
    Nout = _N_TAPS * n_fft                                            # 256, lane-dense
    w1p = _pad_to(_pad_to(w1, 0, Kp), 1, Np).astype(jnp.bfloat16)     # (256, 256)
    b1p = _pad_to(b1, 1, Np)                                          # (1, 256) f32
    w2cat = jnp.transpose(w2, (1, 0, 2)).reshape(Cmid * Fr, KT * n_fft)
    w2p = _pad_to(_pad_to(w2cat, 0, Np), 1, Nout).astype(jnp.bfloat16)  # (256, 256)

    # ---- batch blocking
    BB = _pick_batch_block(B)
    grid = -(-B // BB)
    Bp = grid * BB
    rows = BB * T
    rows_pad = _round_up(rows, 8)

    # halo'd frames: 3 leading + 4 trailing zero frames (4th keeps the dummy 8th tap
    # in-bounds; its weight rows are zero), cast to bf16 for the MXU.
    TH = T + _N_TAPS - 1
    frames_h = jnp.pad(frames, ((0, Bp - B), (_HALO, _N_TAPS - 1 - _HALO), (0, 0)))
    frames_h = frames_h.astype(jnp.bfloat16)                          # (Bp, TH, n_fft)

    y = pl.pallas_call(
        _make_spectral_kernel(BB, T, n_fft, rows_pad),
        out_shape=jax.ShapeDtypeStruct((grid * rows_pad, Nout), jnp.float32),
        grid=(grid,),
        in_specs=[
            pl.BlockSpec((BB, TH, n_fft), lambda i: (i, 0, 0)),
            pl.BlockSpec((Kp, Np), lambda i: (0, 0)),
            pl.BlockSpec((1, Np), lambda i: (0, 0)),
            pl.BlockSpec((Np, Nout), lambda i: (0, 0)),
        ],
        out_specs=pl.BlockSpec((rows_pad, Nout), lambda i: (i, 0)),
        compiler_params=pltpu.CompilerParams(dimension_semantics=("parallel",)),
    )(frames_h, w1p, b1p, w2p)

    # ---- epilogue on the lane-dense slab: 7 shifted adds (= end conv's temporal taps
    # with zero padding), bias, overlap-add + envelope normalization, crop center pad.
    y = y.reshape(grid, rows_pad, Nout)[:, :rows, :].reshape(Bp, T, Nout)
    yp = jnp.pad(y, ((0, 0), (_HALO, _HALO), (0, 0)))
    acc = sum(yp[:, k:k + T, k * n_fft:(k + 1) * n_fft] for k in range(KT))
    frames_out = acc + b2                                             # (Bp, T, n_fft)
    out = _overlap_add(frames_out, window, L, n_fft, hop)
    return out[:B, None, :]                                           # (B, 1, L)


# ----------------------------- pure-JAX f32 reference (same folded weights) -----------------------------
def _spectral_reference(frames, w1, b1, w2, b2):
    KT = _CONV_K
    _, T, _ = frames.shape
    fpad = jnp.pad(frames, ((0, 0), (_HALO, _HALO), (0, 0)))
    fcat = jnp.concatenate([fpad[:, k:k + T, :] for k in range(KT)], axis=-1)
    mid = jnp.einsum("btk,kn->btn", fcat, w1) + b1
    midp = jnp.pad(mid, ((0, 0), (_HALO, _HALO), (0, 0)))
    acc = sum(jnp.einsum("btn,nj->btj", midp[:, k:k + T, :], w2[k]) for k in range(KT))
    return acc + b2


def ffcse_reference(params, x, t):
    n_fft = STFT_PARAMS["n_fft"]
    hop = STFT_PARAMS["hop_length"]
    Fr = n_fft // 2 + 1
    B, _, L = x.shape
    window = hann_window(STFT_PARAMS["win_length"])
    frames, _, _ = _frames_from_signal(x, n_fft, hop)
    w1, b1, w2, b2 = _folded_weights(params, window, n_fft, Fr)
    frames_out = _spectral_reference(frames, w1, b1, w2, b2)
    return _overlap_add(frames_out, window, L, n_fft, hop)[:, None, :]


# ----------------------------- params -----------------------------
def init_params(key, out_channels):
    ks = jax.random.split(key, 9)
    return {
        "rff_gaussian": jax.random.normal(ks[0], (1, 64), jnp.float32),
        "proj1_w": 0.05 * jax.random.normal(ks[1], (512, 128), jnp.float32),
        "proj1_b": 0.01 * jax.random.normal(ks[2], (512,), jnp.float32),
        "proj2_w": 0.05 * jax.random.normal(ks[3], (512, 512), jnp.float32),
        "proj2_b": 0.01 * jax.random.normal(ks[4], (512,), jnp.float32),
        "start_w": 0.05 * jax.random.normal(ks[5], (out_channels, 2, 7, 7), jnp.float32),
        "start_b": 0.01 * jax.random.normal(ks[6], (out_channels,), jnp.float32),
        "end_w": 0.05 * jax.random.normal(ks[7], (2, out_channels, 7, 7), jnp.float32),
        "end_b": 0.01 * jax.random.normal(ks[8], (2,), jnp.float32),
    }


if __name__ == "__main__":
    key = jax.random.PRNGKey(0)
    kx, kp = jax.random.split(key)
    B, L = 8, 256
    x = jax.random.normal(kx, (B, 1, L), jnp.float32)          # audio input (B, 1, L)
    t = jnp.full((B,), 100.0, jnp.float32)                     # sigma conditioning
    params = init_params(kp, MODEL_PARAMS["out_channels"])

    out = jax.jit(ffcse_forward)(params, x, t)
    ref = jax.jit(ffcse_reference)(params, x, t)
    emb = jax.jit(sigma_block)(params, t)                      # exercised (unused at this config)
    jax.block_until_ready((out, ref, emb))

    assert out.shape == (B, 1, L), out.shape
    assert emb.shape == (B, 512), emb.shape
    assert jnp.all(jnp.isfinite(out)) and jnp.all(jnp.isfinite(emb))
    rel_err = float(jnp.max(jnp.abs(out - ref)) / (jnp.max(jnp.abs(ref)) + 1e-6))
    assert rel_err < 5e-2, rel_err                             # bf16 vs f32 reference
    print("KERNEL_OK")
</pallas_src>

<mosaic_0001>
module attributes {stable_mosaic.version = 11 : i64} {
  func.func @kernel(%arg0: i32, %arg1: memref<4x40x32xbf16, #tpu.memory_space<vmem>>, %arg2: memref<256x256xbf16, #tpu.memory_space<vmem>>, %arg3: memref<1x256xf32, #tpu.memory_space<vmem>>, %arg4: memref<256x256xbf16, #tpu.memory_space<vmem>>, %arg5: memref<136x256xf32, #tpu.memory_space<vmem>>) attributes {dimension_semantics = [#tpu.dimension_semantics<parallel>], iteration_bounds = array<i64: 2>, scalar_prefetch = 0 : i64, scratch_operands = 0 : i64, tpu.core_type = #tpu.core_type<tc>, window_params = [{transform_indices = @transform_0, window_bounds = array<i64: 4, 40, 32>}, {pipeline_mode = #tpu.pipeline_mode<synchronous>, transform_indices = @transform_1, window_bounds = array<i64: 256, 256>}, {pipeline_mode = #tpu.pipeline_mode<synchronous>, transform_indices = @transform_2, window_bounds = array<i64: 1, 256>}, {pipeline_mode = #tpu.pipeline_mode<synchronous>, transform_indices = @transform_3, window_bounds = array<i64: 256, 256>}, {transform_indices = @transform_4, window_bounds = array<i64: 136, 256>}]} {
    %c0 = arith.constant 0 : index
    %c0_0 = arith.constant 0 : index
    %c0_1 = arith.constant 0 : index
    %0 = vector.load %arg1[%c0, %c0_0, %c0_1] : memref<4x40x32xbf16, #tpu.memory_space<vmem>>, vector<4x40x32xbf16>
    %1 = vector.extract_strided_slice %0 {offsets = [0, 0, 0], sizes = [1, 40, 32], strides = [1, 1, 1]} : vector<4x40x32xbf16> to vector<1x40x32xbf16>
    %2 = vector.shape_cast %1 : vector<1x40x32xbf16> to vector<40x32xbf16>
    %3 = vector.extract_strided_slice %2 {offsets = [0, 0], sizes = [33, 32], strides = [1, 1]} : vector<40x32xbf16> to vector<33x32xbf16>
    %4 = vector.extract_strided_slice %2 {offsets = [1, 0], sizes = [33, 32], strides = [1, 1]} : vector<40x32xbf16> to vector<33x32xbf16>
    %5 = vector.extract_strided_slice %2 {offsets = [2, 0], sizes = [33, 32], strides = [1, 1]} : vector<40x32xbf16> to vector<33x32xbf16>
    %6 = vector.extract_strided_slice %2 {offsets = [3, 0], sizes = [33, 32], strides = [1, 1]} : vector<40x32xbf16> to vector<33x32xbf16>
    %7 = vector.extract_strided_slice %2 {offsets = [4, 0], sizes = [33, 32], strides = [1, 1]} : vector<40x32xbf16> to vector<33x32xbf16>
    %8 = vector.extract_strided_slice %2 {offsets = [5, 0], sizes = [33, 32], strides = [1, 1]} : vector<40x32xbf16> to vector<33x32xbf16>
    %9 = vector.extract_strided_slice %2 {offsets = [6, 0], sizes = [33, 32], strides = [1, 1]} : vector<40x32xbf16> to vector<33x32xbf16>
    %10 = vector.extract_strided_slice %2 {offsets = [7, 0], sizes = [33, 32], strides = [1, 1]} : vector<40x32xbf16> to vector<33x32xbf16>
    %11 = tpu.concatenate %3, %4, %5, %6, %7, %8, %9, %10 in 1 : vector<33x32xbf16>, vector<33x32xbf16>, vector<33x32xbf16>, vector<33x32xbf16>, vector<33x32xbf16>, vector<33x32xbf16>, vector<33x32xbf16>, vector<33x32xbf16> -> vector<33x256xbf16>
    %12 = vector.extract_strided_slice %0 {offsets = [1, 0, 0], sizes = [1, 40, 32], strides = [1, 1, 1]} : vector<4x40x32xbf16> to vector<1x40x32xbf16>
    %13 = vector.shape_cast %12 : vector<1x40x32xbf16> to vector<40x32xbf16>
    %14 = vector.extract_strided_slice %13 {offsets = [0, 0], sizes = [33, 32], strides = [1, 1]} : vector<40x32xbf16> to vector<33x32xbf16>
    %15 = vector.extract_strided_slice %13 {offsets = [1, 0], sizes = [33, 32], strides = [1, 1]} : vector<40x32xbf16> to vector<33x32xbf16>
    %16 = vector.extract_strided_slice %13 {offsets = [2, 0], sizes = [33, 32], strides = [1, 1]} : vector<40x32xbf16> to vector<33x32xbf16>
    %17 = vector.extract_strided_slice %13 {offsets = [3, 0], sizes = [33, 32], strides = [1, 1]} : vector<40x32xbf16> to vector<33x32xbf16>
    %18 = vector.extract_strided_slice %13 {offsets = [4, 0], sizes = [33, 32], strides = [1, 1]} : vector<40x32xbf16> to vector<33x32xbf16>
    %19 = vector.extract_strided_slice %13 {offsets = [5, 0], sizes = [33, 32], strides = [1, 1]} : vector<40x32xbf16> to vector<33x32xbf16>
    %20 = vector.extract_strided_slice %13 {offsets = [6, 0], sizes = [33, 32], strides = [1, 1]} : vector<40x32xbf16> to vector<33x32xbf16>
    %21 = vector.extract_strided_slice %13 {offsets = [7, 0], sizes = [33, 32], strides = [1, 1]} : vector<40x32xbf16> to vector<33x32xbf16>
    %22 = tpu.concatenate %14, %15, %16, %17, %18, %19, %20, %21 in 1 : vector<33x32xbf16>, vector<33x32xbf16>, vector<33x32xbf16>, vector<33x32xbf16>, vector<33x32xbf16>, vector<33x32xbf16>, vector<33x32xbf16>, vector<33x32xbf16> -> vector<33x256xbf16>
    %23 = vector.extract_strided_slice %0 {offsets = [2, 0, 0], sizes = [1, 40, 32], strides = [1, 1, 1]} : vector<4x40x32xbf16> to vector<1x40x32xbf16>
    %24 = vector.shape_cast %23 : vector<1x40x32xbf16> to vector<40x32xbf16>
    %25 = vector.extract_strided_slice %24 {offsets = [0, 0], sizes = [33, 32], strides = [1, 1]} : vector<40x32xbf16> to vector<33x32xbf16>
    %26 = vector.extract_strided_slice %24 {offsets = [1, 0], sizes = [33, 32], strides = [1, 1]} : vector<40x32xbf16> to vector<33x32xbf16>
    %27 = vector.extract_strided_slice %24 {offsets = [2, 0], sizes = [33, 32], strides = [1, 1]} : vector<40x32xbf16> to vector<33x32xbf16>
    %28 = vector.extract_strided_slice %24 {offsets = [3, 0], sizes = [33, 32], strides = [1, 1]} : vector<40x32xbf16> to vector<33x32xbf16>
    %29 = vector.extract_strided_slice %24 {offsets = [4, 0], sizes = [33, 32], strides = [1, 1]} : vector<40x32xbf16> to vector<33x32xbf16>
    %30 = vector.extract_strided_slice %24 {offsets = [5, 0], sizes = [33, 32], strides = [1, 1]} : vector<40x32xbf16> to vector<33x32xbf16>
    %31 = vector.extract_strided_slice %24 {offsets = [6, 0], sizes = [33, 32], strides = [1, 1]} : vector<40x32xbf16> to vector<33x32xbf16>
    %32 = vector.extract_strided_slice %24 {offsets = [7, 0], sizes = [33, 32], strides = [1, 1]} : vector<40x32xbf16> to vector<33x32xbf16>
    %33 = tpu.concatenate %25, %26, %27, %28, %29, %30, %31, %32 in 1 : vector<33x32xbf16>, vector<33x32xbf16>, vector<33x32xbf16>, vector<33x32xbf16>, vector<33x32xbf16>, vector<33x32xbf16>, vector<33x32xbf16>, vector<33x32xbf16> -> vector<33x256xbf16>
    %34 = vector.extract_strided_slice %0 {offsets = [3, 0, 0], sizes = [1, 40, 32], strides = [1, 1, 1]} : vector<4x40x32xbf16> to vector<1x40x32xbf16>
    %35 = vector.shape_cast %34 : vector<1x40x32xbf16> to vector<40x32xbf16>
    %36 = vector.extract_strided_slice %35 {offsets = [0, 0], sizes = [33, 32], strides = [1, 1]} : vector<40x32xbf16> to vector<33x32xbf16>
    %37 = vector.extract_strided_slice %35 {offsets = [1, 0], sizes = [33, 32], strides = [1, 1]} : vector<40x32xbf16> to vector<33x32xbf16>
    %38 = vector.extract_strided_slice %35 {offsets = [2, 0], sizes = [33, 32], strides = [1, 1]} : vector<40x32xbf16> to vector<33x32xbf16>
    %39 = vector.extract_strided_slice %35 {offsets = [3, 0], sizes = [33, 32], strides = [1, 1]} : vector<40x32xbf16> to vector<33x32xbf16>
    %40 = vector.extract_strided_slice %35 {offsets = [4, 0], sizes = [33, 32], strides = [1, 1]} : vector<40x32xbf16> to vector<33x32xbf16>
    %41 = vector.extract_strided_slice %35 {offsets = [5, 0], sizes = [33, 32], strides = [1, 1]} : vector<40x32xbf16> to vector<33x32xbf16>
    %42 = vector.extract_strided_slice %35 {offsets = [6, 0], sizes = [33, 32], strides = [1, 1]} : vector<40x32xbf16> to vector<33x32xbf16>
    %43 = vector.extract_strided_slice %35 {offsets = [7, 0], sizes = [33, 32], strides = [1, 1]} : vector<40x32xbf16> to vector<33x32xbf16>
    %44 = tpu.concatenate %36, %37, %38, %39, %40, %41, %42, %43 in 1 : vector<33x32xbf16>, vector<33x32xbf16>, vector<33x32xbf16>, vector<33x32xbf16>, vector<33x32xbf16>, vector<33x32xbf16>, vector<33x32xbf16>, vector<33x32xbf16> -> vector<33x256xbf16>
    %cst = arith.constant 0.000000e+00 : bf16
    %45 = vector.broadcast %cst : bf16 to vector<4x256xbf16>
    %46 = tpu.concatenate %11, %22, %33, %44, %45 in 0 : vector<33x256xbf16>, vector<33x256xbf16>, vector<33x256xbf16>, vector<33x256xbf16>, vector<4x256xbf16> -> vector<136x256xbf16>
    %c0_2 = arith.constant 0 : index
    %c0_3 = arith.constant 0 : index
    %47 = vector.load %arg2[%c0_2, %c0_3] : memref<256x256xbf16, #tpu.memory_space<vmem>>, vector<256x256xbf16>
    %cst_4 = arith.constant dense<0.000000e+00> : vector<136x256xf32>
    %48 = tpu.matmul %46, %47, %cst_4 {dimension_numbers = #tpu.dot_dimension_numbers<[1], [0], [0], [1], [0, 0, 1, 1], [], []>} : vector<136x256xbf16>, vector<256x256xbf16>, vector<136x256xf32> -> vector<136x256xf32>
    %c0_5 = arith.constant 0 : index
    %c0_6 = arith.constant 0 : index
    %49 = vector.load %arg3[%c0_5, %c0_6] : memref<1x256xf32, #tpu.memory_space<vmem>>, vector<1x256xf32>
    %50 = vector.broadcast %49 : vector<1x256xf32> to vector<136x256xf32>
    %51 = arith.addf %48, %50 : vector<136x256xf32>
    %52 = arith.truncf %51 : vector<136x256xf32> to vector<136x256xbf16>
    %c0_7 = arith.constant 0 : index
    %c0_8 = arith.constant 0 : index
    %53 = vector.load %arg4[%c0_7, %c0_8] : memref<256x256xbf16, #tpu.memory_space<vmem>>, vector<256x256xbf16>
    %cst_9 = arith.constant dense<0.000000e+00> : vector<136x256xf32>
    %54 = tpu.matmul %52, %53, %cst_9 {dimension_numbers = #tpu.dot_dimension_numbers<[1], [0], [0], [1], [0, 0, 1, 1], [], []>} : vector<136x256xbf16>, vector<256x256xbf16>, vector<136x256xf32> -> vector<136x256xf32>
    %c0_10 = arith.constant 0 : index
    %c0_11 = arith.constant 0 : index
    %55 = vector.load %arg5[%c0_10, %c0_11] : memref<136x256xf32, #tpu.memory_space<vmem>>, vector<136x256xf32>
    tpu.vector_store %arg5[%c0_10, %c0_11], %54 {strides = array<i32>} : memref<136x256xf32, #tpu.memory_space<vmem>>, vector<136x256xf32>,
    return
  }
  func.func @transform_0(%arg0: i32) -> (i32, i32, i32) {
    %c0_i32 = arith.constant 0 : i32
    %c0_i32_0 = arith.constant 0 : i32
    %c0_i32_1 = arith.constant 0 : i32
    return %arg0, %c0_i32, %c0_i32_0 : i32, i32, i32
  }
  func.func @transform_1(%arg0: i32) -> (i32, i32) {
    %c0_i32 = arith.constant 0 : i32
    %c0_i32_0 = arith.constant 0 : i32
    %c0_i32_1 = arith.constant 0 : i32
    return %c0_i32, %c0_i32_0 : i32, i32
  }
  func.func @transform_2(%arg0: i32) -> (i32, i32) {
    %c0_i32 = arith.constant 0 : i32
    %c0_i32_0 = arith.constant 0 : i32
    %c0_i32_1 = arith.constant 0 : i32
    return %c0_i32, %c0_i32_0 : i32, i32
  }
  func.func @transform_3(%arg0: i32) -> (i32, i32) {
    %c0_i32 = arith.constant 0 : i32
    %c0_i32_0 = arith.constant 0 : i32
    %c0_i32_1 = arith.constant 0 : i32
    return %c0_i32, %c0_i32_0 : i32, i32
  }
  func.func @transform_4(%arg0: i32) -> (i32, i32) {
    %c0_i32 = arith.constant 0 : i32
    %c0_i32_0 = arith.constant 0 : i32
    return %arg0, %c0_i32 : i32, i32
  }
}

</mosaic_0001>

<llo_original>
// kernel: ffcse_forward.1
$region0: #{ffcse_forward.1}
  #allocation0 [shape = 'u32[]', space=smem, size = 0x4, offset = 0x4, fixed_abs, tag = 'smem constant byte address 0x4 - core index']
  #allocation1 [shape = 'u32[144,128]{1,0:T(1,128)}', space=vmem, size = 0x12000, scoped, tag = 'internal scratch']
  %s0 = inlined_call_operand.vmem [shape: bf16[8,40,32], index: 0, kind: input, shape index: {}]
  %s1 = inlined_call_operand.vmem [shape: bf16[256,256], index: 1, kind: input, shape index: {}]
  %s2 = inlined_call_operand.vmem [shape: f32[1,256], index: 2, kind: input, shape index: {}]
  %s3 = inlined_call_operand.vmem [shape: bf16[256,256], index: 3, kind: input, shape index: {}]
  %s4 = inlined_call_operand.vmem [shape: f32[272,256], index: 4, kind: output, shape index: {}]
  %s5 = sld [smem:[#allocation0]]
  $region49: #{ffcse_forward.1} parent=0
    _
  %s7 = ssub.s32 1, %s5
  %s8 = scalar_select 0, %s7, %s5
  loop: start=0, step=1, limit=4
  $region2: #{ffcse_forward.1} parent=0 // loop_pre_header
    _
  $region3: #{ffcse_forward.1} parent=0 // loop_header
    %s10 = sphi 0, %s14
    %p11 = scmp.ge.s32.totalorder %s10, 4
    %s20 = sphi 0, %s22
    %s23 = sphi 0, %s20
    %s24 = sphi 0, %s23
    %s40 = sphi 0, %s24
    %s44 = sphi 0, %s44
    %s46 = sphi 0, %s44
    %s47 = sphi 0, %s46
    %s61 = sphi 0, %s47
    %s65 = sphi 0, %s65
    %s67 = sphi 0, %s65
    %s68 = sphi 0, %s67
    %s82 = sphi 0, %s68
    %s86 = sphi 0, %s86
    %s88 = sphi 0, %s86
    %s89 = sphi 0, %s88
    %s103 = sphi 0, %s89
    %s109 = sphi 0, %s111
    %s112 = sphi 0, %s109
    %s113 = sphi 0, %s112
    %s129 = sphi 0, %s113
  $region4: #{ffcse_forward.1} parent=0 // loop_header_branch
    %13 = sbr.rel (%p11) target = $region8
  $region5: #{ffcse_forward.1} parent=0 // loop_body
    %s15 = ssub.s32 %s10, 1
    %s16 = ssub.s32 %s10, 2
    %s17 = sadd.s32 %s10, 1
    %s18 = ssub.s32 %s10, %s17
    %p19 = scmp.eq.s32.totalorder %s18, 0
    %s21 = sadd.s32 %s20, 1
    %s22 = scalar_select %p19, %s20, %s21
    %p25 = pneg %p19
    %p26 = scmp.eq.s32.totalorder %s10, 1
    %p27 = por %p25, %p26
    %p28 = scmp.ne.s32.totalorder %s20, %s23
    %p29 = scmp.eq.s32.totalorder %s10, 0
    %p30 = por %p28, %p29
    %p31 = scmp.ne.s32.totalorder %s20, %s23
    %p32 = scmp.eq.s32.totalorder %s15, 1
    %p33 = por %p31, %p32
    %p34 = scmp.ne.s32.totalorder %s23, %s24
    %p35 = scmp.eq.s32.totalorder %s15, 0
    %p36 = por %p34, %p35
    %p37 = scmp.ne.s32.totalorder %s23, %s24
    %p38 = scmp.eq.s32.totalorder %s16, 1
    %p39 = por %p37, %p38
    %p41 = scmp.ne.s32.totalorder %s24, %s40
    %p42 = scmp.eq.s32.totalorder %s16, 0
    %p43 = por %p41, %p42
    %s45 = sadd.s32 %s44, 1
    %p48 = scmp.eq.s32.totalorder %s10, 1
    %p49 = scmp.ne.s32.totalorder %s44, %s46
    %p50 = scmp.eq.s32.totalorder %s10, 0
    %p51 = por %p49, %p50
    %p52 = scmp.ne.s32.totalorder %s44, %s46
    %p53 = scmp.eq.s32.totalorder %s15, 1
    %p54 = por %p52, %p53
    %p55 = scmp.ne.s32.totalorder %s46, %s47
    %p56 = scmp.eq.s32.totalorder %s15, 0
    %p57 = por %p55, %p56
    %p58 = scmp.ne.s32.totalorder %s46, %s47
    %p59 = scmp.eq.s32.totalorder %s16, 1
    %p60 = por %p58, %p59
    %p62 = scmp.ne.s32.totalorder %s47, %s61
    %p63 = scmp.eq.s32.totalorder %s16, 0
    %p64 = por %p62, %p63
    %s66 = sadd.s32 %s65, 1
    %p69 = scmp.eq.s32.totalorder %s10, 1
    %p70 = scmp.ne.s32.totalorder %s65, %s67
    %p71 = scmp.eq.s32.totalorder %s10, 0
    %p72 = por %p70, %p71
    %p73 = scmp.ne.s32.totalorder %s65, %s67
    %p74 = scmp.eq.s32.totalorder %s15, 1
    %p75 = por %p73, %p74
    %p76 = scmp.ne.s32.totalorder %s67, %s68
    %p77 = scmp.eq.s32.totalorder %s15, 0
    %p78 = por %p76, %p77
    %p79 = scmp.ne.s32.totalorder %s67, %s68
    %p80 = scmp.eq.s32.totalorder %s16, 1
    %p81 = por %p79, %p80
    %p83 = scmp.ne.s32.totalorder %s68, %s82
    %p84 = scmp.eq.s32.totalorder %s16, 0
    %p85 = por %p83, %p84
    %s87 = sadd.s32 %s86, 1
    %p90 = scmp.eq.s32.totalorder %s10, 1
    %p91 = scmp.ne.s32.totalorder %s86, %s88
    %p92 = scmp.eq.s32.totalorder %s10, 0
    %p93 = por %p91, %p92
    %p94 = scmp.ne.s32.totalorder %s86, %s88
    %p95 = scmp.eq.s32.totalorder %s15, 1
    %p96 = por %p94, %p95
    %p97 = scmp.ne.s32.totalorder %s88, %s89
    %p98 = scmp.eq.s32.totalorder %s15, 0
    %p99 = por %p97, %p98
    %p100 = scmp.ne.s32.totalorder %s88, %s89
    %p101 = scmp.eq.s32.totalorder %s16, 1
    %p102 = por %p100, %p101
    %p104 = scmp.ne.s32.totalorder %s89, %s103
    %p105 = scmp.eq.s32.totalorder %s16, 0
    %p106 = por %p104, %p105
    %s107 = ssub.s32 %s10, %s17
    %p108 = scmp.eq.s32.totalorder %s107, 0
    %s110 = sadd.s32 %s109, 1
    %s111 = scalar_select %p108, %s109, %s110
    %p114 = pneg %p108
    %p115 = scmp.eq.s32.totalorder %s10, 1
    %p116 = por %p114, %p115
    %p117 = scmp.ne.s32.totalorder %s109, %s112
    %p118 = scmp.eq.s32.totalorder %s10, 0
    %p119 = por %p117, %p118
    %p120 = scmp.ne.s32.totalorder %s109, %s112
    %p121 = scmp.eq.s32.totalorder %s15, 1
    %p122 = por %p120, %p121
    %p123 = scmp.ne.s32.totalorder %s112, %s113
    %p124 = scmp.eq.s32.totalorder %s15, 0
    %p125 = por %p123, %p124
    %p126 = scmp.ne.s32.totalorder %s112, %s113
    %p127 = scmp.eq.s32.totalorder %s16, 1
    %p128 = por %p126, %p127
    %p130 = scmp.ne.s32.totalorder %s113, %s129
    %p131 = scmp.eq.s32.totalorder %s16, 0
    %p132 = por %p130, %p131
    %p133 = scmp.le.s32.totalorder 1, %s10
    %p134 = scmp.lt.s32.totalorder %s10, 3
    %p135 = pnand %p133, %p134
    %p136 = pneg %p135
    // Predicated region
    $region9: #{ffcse_forward.1} parent=5 // pred_check
      _
    $region10: #{ffcse_forward.1} parent=5 // pred_check_branch
      %138 = sbr.rel (%p135) target = $region12
    $region11: #{ffcse_forward.1} parent=5 // pred_region
      %s139 = ssub.s32 %s10, 1
      // Predicated region
      $region13: #{ffcse_forward.1} parent=11 // pred_check
        %p140 = pneg %p57
      $region14: #{ffcse_forward.1} parent=11 // pred_check_branch
        %142 = sbr.rel (%p140) target = $region16
      $region15: #{ffcse_forward.1} parent=11 // pred_region
        _
      $region16: #{ffcse_forward.1} parent=11 // pred_fallthru
        _
      // Predicated region
      $region17: #{ffcse_forward.1} parent=11 // pred_check
        %p143 = pneg %p78
      $region18: #{ffcse_forward.1} parent=11 // pred_check_branch
        %145 = sbr.rel (%p143) target = $region20
      $region19: #{ffcse_forward.1} parent=11 // pred_region
        _
      $region20: #{ffcse_forward.1} parent=11 // pred_fallthru
        _
      // Predicated region
      $region21: #{ffcse_forward.1} parent=11 // pred_check
        %p146 = pneg %p99
      $region22: #{ffcse_forward.1} parent=11 // pred_check_branch
        %148 = sbr.rel (%p146) target = $region24
      $region23: #{ffcse_forward.1} parent=11 // pred_region
        _
      $region24: #{ffcse_forward.1} parent=11 // pred_fallthru
        _
    $region12: #{ffcse_forward.1} parent=5 // pred_fallthru
      _
    %p149 = scmp.lt.s32.totalorder %s10, 2
    // Predicated region
    $region25: #{ffcse_forward.1} parent=5 // pred_check
      %p150 = pneg %p149
    $region26: #{ffcse_forward.1} parent=5 // pred_check_branch
      %152 = sbr.rel (%p150) target = $region28
    $region27: #{ffcse_forward.1} parent=5 // pred_region
      // Predicated region
      $region29: #{ffcse_forward.1} parent=27 // pred_check
        %p153 = pneg %p30
      $region30: #{ffcse_forward.1} parent=27 // pred_check_branch
        %155 = sbr.rel (%p153) target = $region32
      $region31: #{ffcse_forward.1} parent=27 // pred_region
        %s156 = smul.u32 4, %s10
        %p157 = scmp.lt.s32.totalorder %s156, 7
        %s158 = scalar_select %p157, %s156, 7
        %s159 = smul.addr %s158, 5
        %s160 = smul.addr %s159, 4
        %s161 = scalar_lea.vmem %s0, %s160
        %s162 = smul.u32 4, %s10
      $region32: #{ffcse_forward.1} parent=27 // pred_fallthru
        _
    $region28: #{ffcse_forward.1} parent=5 // pred_fallthru
      _
    %p163 = scmp.le.s32.totalorder 1, %s10
    %p164 = scmp.lt.s32.totalorder %s10, 3
    %p165 = pnand %p163, %p164
    %p166 = pneg %p165
    // Predicated region
    $region33: #{ffcse_forward.1} parent=5 // pred_check
      _
    $region34: #{ffcse_forward.1} parent=5 // pred_check_branch
      %168 = sbr.rel (%p165) target = $region36
    $region35: #{ffcse_forward.1} parent=5 // pred_region
      %s169 = ssub.s32 %s10, 1
      %s170 = smul.u32 4, %s15
      %p171 = scmp.lt.s32.totalorder %s170, 7
      %s172 = scalar_select %p171, %s170, 7
      %s173 = smul.addr %s172, 5
      %s174 = smul.addr %s173, 4
      %s175 = scalar_lea.vmem %s0, %s174
      %p176 = pneg %p36
      %p177 = pneg %p33
      %p178 = pneg %p57
      %p179 = pneg %p54
      %p180 = pneg %p78
      %p181 = pneg %p75
      %p182 = pneg %p99
      %p183 = pneg %p96
      %p184 = pneg %p125
      %p185 = pneg %p122
      %s186 = smul.u32 17, %s15
      %p187 = scmp.lt.s32.totalorder %s186, 33
      %s188 = scalar_select %p187, %s186, 33
      %s189 = smul.addr %s188, 2
      %s190 = smul.addr %s189, 8
      %s191 = scalar_lea.vmem %s4, %s190
      %s192 = smul.u32 4, %s15
      %p193 = scmp.lt.s32.totalorder %s192, 7
      %s194 = scalar_select %p193, %s192, 7
      %s195 = smul.addr %s194, 5
      %s196 = smul.addr %s195, 4
      %s197 = scalar_lea.vmem %s0, %s196
      %s198 = smul.u32 4, %s15
      %s199 = smul.u32 17, %s15
      %p200 = scmp.lt.s32.totalorder %s199, 33
      %s201 = scalar_select %p200, %s199, 33
      %s202 = smul.addr %s201, 2
      %s203 = smul.addr %s202, 8
      %s204 = scalar_lea.vmem %s4, %s203
      %s205 = smul.u32 17, %s15
      %v207 = vld [vmem:[%s197] sm:$0xf]
      %v208 = vld [vmem:[%s197 + $0x4] sm:$0xf]
      %v209 = vld [vmem:[%s197 + $0x8] sm:$0xf]
      %v210 = vld [vmem:[%s197 + $0xc] sm:$0xf]
      %v211 = vld [vmem:[%s197 + $0x10] sm:$0xf]
      %v212 = vld [vmem:[%s197 + $0x14] sm:$0xf]
      %v213 = vld [vmem:[%s197 + $0x18] sm:$0xf]
      %v214 = vld [vmem:[%s197 + $0x1c] sm:$0xf]
      %v215 = vld [vmem:[%s197 + $0x20] sm:$0xf]
      %v216 = vld [vmem:[%s197 + $0x24] sm:$0xf]
      %v217 = vld [vmem:[%s197 + $0x28] sm:$0xf]
      %v218 = vld [vmem:[%s197 + $0x2c] sm:$0xf]
      %v219 = vld [vmem:[%s197 + $0x30] sm:$0xf]
      %v220 = vld [vmem:[%s197 + $0x34] sm:$0xf]
      %v221 = vld [vmem:[%s197 + $0x38] sm:$0xf]
      %v222 = vld [vmem:[%s197 + $0x3c] sm:$0xf]
      %v223 = vld [vmem:[%s197 + $0x40] sm:$0xf]
      %v224 = vld [vmem:[%s197 + $0x44] sm:$0xf]
      %v225 = vld [vmem:[%s197 + $0x48] sm:$0xf]
      %v226 = vld [vmem:[%s197 + $0x4c] sm:$0xf]
      %v232 = vunpack.c.l.b16 %v207
      %v233 = vunpack.c.l.b16 %v208
      %v234 = vunpack.c.l.b16 %v209
      %v235 = vunpack.c.l.b16 %v210
      %v236 = vunpack.c.l.b16 %v211
      %v237 = vpack.c.b16 %v233, %v232
      %v238 = vpack.c.b16 %v235, %v234
      %v239 = vpack.c.b16 %v236, %v236
      %vm240 = vsmask.f32 7424
      %v242 = vshrl.u32 %v237, 16
      %v244 = vshll.u32 %v237, 16
      %v246 = vrot.slane %v244, 1
      %v247 = vor.u32 %v242, %v246
      %v249 = vshll.u32 %v238, 16
      %v251 = vrot.slane %v249, 1
      %v252 = vsel %vm240, %v247, %v251
      %v253 = vshrl.u32 %v238, 16
      %v255 = vor.u32 %v253, %v251
      %v257 = vshll.u32 %v239, 16
      %v259 = vrot.slane %v257, 1
      %v260 = vsel %vm240, %v255, %v259
      %v261 = vshrl.u32 %v239, 16
      %263 = vrot.lane.b32.xlu0 %v252, 32
      %v264 = vpop.permute.xlu0 %263
      %265 = vrot.lane.b32.xlu0 %v260, 32
      %v266 = vpop.permute.xlu0 %265
      %267 = vrot.lane.b32.xlu0 %v261, 32
      %v268 = vpop.permute.xlu0 %267
      %vm269 = vcmask 1046528
      %v270 = vrot.slane %v237, 1
      %v271 = vrot.slane %v238, 1
      %v272 = vsel %vm269, %v270, %v271
      %v273 = vrot.slane %v239, 1
      %v274 = vsel %vm269, %v271, %v273
      %275 = vrot.lane.b32.xlu0 %v272, 64
      %v276 = vpop.permute.xlu0 %275
      %277 = vrot.lane.b32.xlu0 %v274, 64
      %v278 = vpop.permute.xlu0 %277
      %279 = vrot.lane.b32.xlu0 %v273, 64
      %v280 = vpop.permute.xlu0 %279
      %vm281 = vsmask.f32 6400
      %v282 = vrot.slane %v242, 1
      %v283 = vrot.slane %v244, 2
      %v284 = vor.u32 %v282, %v283
      %v285 = vrot.slane %v253, 1
      %v286 = vrot.slane %v249, 2
      %v287 = vor.u32 %v285, %v286
      %v288 = vsel %vm281, %v284, %v287
      %v289 = vrot.slane %v261, 1
      %v290 = vrot.slane %v257, 2
      %v291 = vor.u32 %v289, %v290
      %v292 = vsel %vm281, %v287, %v291
      %293 = vrot.lane.b32.xlu0 %v288, 96
      %v294 = vpop.permute.xlu0 %293
      %295 = vrot.lane.b32.xlu0 %v292, 96
      %v296 = vpop.permute.xlu0 %295
      %297 = vrot.lane.b32.xlu0 %v289, 96
      %v298 = vpop.permute.xlu0 %297
      %vm299 = vcmask 1045504
      %v300 = vrot.slane %v237, 2
      %v301 = vrot.slane %v238, 2
      %v302 = vsel %vm299, %v300, %v301
      %v303 = vrot.slane %v239, 2
      %v304 = vsel %vm299, %v301, %v303
      %vm305 = vsmask.f32 5376
      %v306 = vrot.slane %v242, 2
      %v307 = vrot.slane %v244, 3
      %v308 = vor.u32 %v306, %v307
      %v309 = vrot.slane %v253, 2
      %v310 = vrot.slane %v249, 3
      %v311 = vor.u32 %v309, %v310
      %v312 = vsel %vm305, %v308, %v311
      %v313 = vrot.slane %v261, 2
      %v314 = vrot.slane %v257, 3
      %v315 = vor.u32 %v313, %v314
      %v316 = vsel %vm305, %v311, %v315
      %317 = vrot.lane.b32.xlu0 %v312, 32
      %v318 = vpop.permute.xlu0 %317
      %319 = vrot.lane.b32.xlu0 %v316, 32
      %v320 = vpop.permute.xlu0 %319
      %321 = vrot.lane.b32.xlu0 %v313, 32
      %v322 = vpop.permute.xlu0 %321
      %vm323 = vcmask 1044480
      %v324 = vrot.slane %v237, 3
      %v325 = vrot.slane %v238, 3
      %v326 = vsel %vm323, %v324, %v325
      %v327 = vrot.slane %v239, 3
      %v328 = vsel %vm323, %v325, %v327
      %329 = vrot.lane.b32.xlu0 %v326, 64
      %v330 = vpop.permute.xlu0 %329
      %331 = vrot.lane.b32.xlu0 %v328, 64
      %v332 = vpop.permute.xlu0 %331
      %333 = vrot.lane.b32.xlu0 %v327, 64
      %v334 = vpop.permute.xlu0 %333
      %vm335 = vsmask.f32 4352
      %v336 = vrot.slane %v242, 3
      %v337 = vrot.slane %v244, 4
      %v338 = vor.u32 %v336, %v337
      %v339 = vrot.slane %v253, 3
      %v340 = vrot.slane %v249, 4
      %v341 = vor.u32 %v339, %v340
      %v342 = vsel %vm335, %v338, %v341
      %v343 = vrot.slane %v261, 3
      %v344 = vrot.slane %v257, 4
      %v345 = vor.u32 %v343, %v344
      %v346 = vsel %vm335, %v341, %v345
      %347 = vrot.lane.b32.xlu0 %v342, 96
      %v348 = vpop.permute.xlu0 %347
      %349 = vrot.lane.b32.xlu0 %v346, 96
      %v350 = vpop.permute.xlu0 %349
      %351 = vrot.lane.b32.xlu0 %v343, 96
      %v352 = vpop.permute.xlu0 %351
      %vm353 = vcmask 261120
      %v355 = vsel %vm353, %v237, %v264
      %v357 = vsel %vm353, %v238, %v266
      %v359 = vsel %vm353, %v239, %v268
      %vm360 = vcmask 523264
      %v362 = vsel %vm360, %v355, %v276
      %v364 = vsel %vm360, %v357, %v278
      %v366 = vsel %vm360, %v359, %v280
      %vm367 = vcmask 785408
      %v369 = vsel %vm367, %v362, %v294
      %v372 = vsel %vm367, %v364, %v296
      %v375 = vsel %vm367, %v366, %v298
      %v379 = vsel %vm353, %v302, %v318
      %v382 = vsel %vm353, %v304, %v320
      %v385 = vsel %vm353, %v303, %v322
      %v387 = vsel %vm360, %v379, %v330
      %v389 = vsel %vm360, %v382, %v332
      %v391 = vsel %vm360, %v385, %v334
      %v393 = vsel %vm367, %v387, %v348
      %v396 = vsel %vm367, %v389, %v350
      %v399 = vsel %vm367, %v391, %v352
      %v406 = vunpack.c.l.b16 %v212
      %v407 = vunpack.c.l.b16 %v213
      %v408 = vunpack.c.l.b16 %v214
      %v409 = vunpack.c.l.b16 %v215
      %v410 = vunpack.c.l.b16 %v216
      %v411 = vpack.c.b16 %v407, %v406
      %v412 = vpack.c.b16 %v409, %v408
      %v413 = vpack.c.b16 %v410, %v410
      %v415 = vshrl.u32 %v411, 16
      %v417 = vshll.u32 %v411, 16
      %v419 = vrot.slane %v417, 1
      %v420 = vor.u32 %v415, %v419
      %v422 = vshll.u32 %v412, 16
      %v424 = vrot.slane %v422, 1
      %v425 = vsel %vm240, %v420, %v424
      %v426 = vshrl.u32 %v412, 16
      %v428 = vor.u32 %v426, %v424
      %v430 = vshll.u32 %v413, 16
      %v432 = vrot.slane %v430, 1
      %v433 = vsel %vm240, %v428, %v432
      %v434 = vshrl.u32 %v413, 16
      %436 = vrot.lane.b32.xlu0 %v425, 32
      %v437 = vpop.permute.xlu0 %436
      %438 = vrot.lane.b32.xlu0 %v433, 32
      %v439 = vpop.permute.xlu0 %438
      %440 = vrot.lane.b32.xlu0 %v434, 32
      %v441 = vpop.permute.xlu0 %440
      %v442 = vrot.slane %v411, 1
      %v443 = vrot.slane %v412, 1
      %v444 = vsel %vm269, %v442, %v443
      %v445 = vrot.slane %v413, 1
      %v446 = vsel %vm269, %v443, %v445
      %447 = vrot.lane.b32.xlu0 %v444, 64
      %v448 = vpop.permute.xlu0 %447
      %449 = vrot.lane.b32.xlu0 %v446, 64
      %v450 = vpop.permute.xlu0 %449
      %451 = vrot.lane.b32.xlu0 %v445, 64
      %v452 = vpop.permute.xlu0 %451
      %v453 = vrot.slane %v415, 1
      %v454 = vrot.slane %v417, 2
      %v455 = vor.u32 %v453, %v454
      %v456 = vrot.slane %v426, 1
      %v457 = vrot.slane %v422, 2
      %v458 = vor.u32 %v456, %v457
      %v459 = vsel %vm281, %v455, %v458
      %v460 = vrot.slane %v434, 1
      %v461 = vrot.slane %v430, 2
      %v462 = vor.u32 %v460, %v461
      %v463 = vsel %vm281, %v458, %v462
      %464 = vrot.lane.b32.xlu0 %v459, 96
      %v465 = vpop.permute.xlu0 %464
      %466 = vrot.lane.b32.xlu0 %v463, 96
      %v467 = vpop.permute.xlu0 %466
      %468 = vrot.lane.b32.xlu0 %v460, 96
      %v469 = vpop.permute.xlu0 %468
      %v470 = vrot.slane %v411, 2
      %v471 = vrot.slane %v412, 2
      %v472 = vsel %vm299, %v470, %v471
      %v473 = vrot.slane %v413, 2
      %v474 = vsel %vm299, %v471, %v473
      %v475 = vrot.slane %v415, 2
      %v476 = vrot.slane %v417, 3
      %v477 = vor.u32 %v475, %v476
      %v478 = vrot.slane %v426, 2
      %v479 = vrot.slane %v422, 3
      %v480 = vor.u32 %v478, %v479
      %v481 = vsel %vm305, %v477, %v480
      %v482 = vrot.slane %v434, 2
      %v483 = vrot.slane %v430, 3
      %v484 = vor.u32 %v482, %v483
      %v485 = vsel %vm305, %v480, %v484
      %486 = vrot.lane.b32.xlu0 %v481, 32
      %v487 = vpop.permute.xlu0 %486
      %488 = vrot.lane.b32.xlu0 %v485, 32
      %v489 = vpop.permute.xlu0 %488
      %490 = vrot.lane.b32.xlu0 %v482, 32
      %v491 = vpop.permute.xlu0 %490
      %v492 = vrot.slane %v411, 3
      %v493 = vrot.slane %v412, 3
      %v494 = vsel %vm323, %v492, %v493
      %v495 = vrot.slane %v413, 3
      %v496 = vsel %vm323, %v493, %v495
      %497 = vrot.lane.b32.xlu0 %v494, 64
      %v498 = vpop.permute.xlu0 %497
      %499 = vrot.lane.b32.xlu0 %v496, 64
      %v500 = vpop.permute.xlu0 %499
      %501 = vrot.lane.b32.xlu0 %v495, 64
      %v502 = vpop.permute.xlu0 %501
      %v503 = vrot.slane %v415, 3
      %v504 = vrot.slane %v417, 4
      %v505 = vor.u32 %v503, %v504
      %v506 = vrot.slane %v426, 3
      %v507 = vrot.slane %v422, 4
      %v508 = vor.u32 %v506, %v507
      %v509 = vsel %vm335, %v505, %v508
      %v510 = vrot.slane %v434, 3
      %v511 = vrot.slane %v430, 4
      %v512 = vor.u32 %v510, %v511
      %v513 = vsel %vm335, %v508, %v512
      %514 = vrot.lane.b32.xlu0 %v509, 96
      %v515 = vpop.permute.xlu0 %514
      %516 = vrot.lane.b32.xlu0 %v513, 96
      %v517 = vpop.permute.xlu0 %516
      %518 = vrot.lane.b32.xlu0 %v510, 96
      %v519 = vpop.permute.xlu0 %518
      %v521 = vsel %vm353, %v411, %v437
      %v523 = vsel %vm353, %v412, %v439
      %v525 = vsel %vm353, %v413, %v441
      %v527 = vsel %vm360, %v521, %v448
      %v529 = vsel %vm360, %v523, %v450
      %v531 = vsel %vm360, %v525, %v452
      %v533 = vsel %vm367, %v527, %v465
      %v535 = vsel %vm367, %v529, %v467
      %v537 = vsel %vm367, %v531, %v469
      %v540 = vsel %vm353, %v472, %v487
      %v543 = vsel %vm353, %v474, %v489
      %v546 = vsel %vm353, %v473, %v491
      %v548 = vsel %vm360, %v540, %v498
      %v550 = vsel %vm360, %v543, %v500
      %v552 = vsel %vm360, %v546, %v502
      %v554 = vsel %vm367, %v548, %v515
      %v556 = vsel %vm367, %v550, %v517
      %v558 = vsel %vm367, %v552, %v519
      %v564 = vunpack.c.l.b16 %v217
      %v565 = vunpack.c.l.b16 %v218
      %v566 = vunpack.c.l.b16 %v219
      %v567 = vunpack.c.l.b16 %v220
      %v568 = vunpack.c.l.b16 %v221
      %v569 = vpack.c.b16 %v565, %v564
      %v570 = vpack.c.b16 %v567, %v566
      %v571 = vpack.c.b16 %v568, %v568
      %v573 = vshrl.u32 %v569, 16
      %v575 = vshll.u32 %v569, 16
      %v577 = vrot.slane %v575, 1
      %v578 = vor.u32 %v573, %v577
      %v580 = vshll.u32 %v570, 16
      %v582 = vrot.slane %v580, 1
      %v583 = vsel %vm240, %v578, %v582
      %v584 = vshrl.u32 %v570, 16
      %v586 = vor.u32 %v584, %v582
      %v588 = vshll.u32 %v571, 16
      %v590 = vrot.slane %v588, 1
      %v591 = vsel %vm240, %v586, %v590
      %v592 = vshrl.u32 %v571, 16
      %594 = vrot.lane.b32.xlu0 %v583, 32
      %v595 = vpop.permute.xlu0 %594
      %596 = vrot.lane.b32.xlu0 %v591, 32
      %v597 = vpop.permute.xlu0 %596
      %598 = vrot.lane.b32.xlu0 %v592, 32
      %v599 = vpop.permute.xlu0 %598
      %v600 = vrot.slane %v569, 1
      %v601 = vrot.slane %v570, 1
      %v602 = vsel %vm269, %v600, %v601
      %v603 = vrot.slane %v571, 1
      %v604 = vsel %vm269, %v601, %v603
      %605 = vrot.lane.b32.xlu0 %v602, 64
      %v606 = vpop.permute.xlu0 %605
      %607 = vrot.lane.b32.xlu0 %v604, 64
      %v608 = vpop.permute.xlu0 %607
      %609 = vrot.lane.b32.xlu0 %v603, 64
      %v610 = vpop.permute.xlu0 %609
      %v611 = vrot.slane %v573, 1
      %v612 = vrot.slane %v575, 2
      %v613 = vor.u32 %v611, %v612
      %v614 = vrot.slane %v584, 1
      %v615 = vrot.slane %v580, 2
      %v616 = vor.u32 %v614, %v615
      %v617 = vsel %vm281, %v613, %v616
      %v618 = vrot.slane %v592, 1
      %v619 = vrot.slane %v588, 2
      %v620 = vor.u32 %v618, %v619
      %v621 = vsel %vm281, %v616, %v620
      %622 = vrot.lane.b32.xlu0 %v617, 96
      %v623 = vpop.permute.xlu0 %622
      %624 = vrot.lane.b32.xlu0 %v621, 96
      %v625 = vpop.permute.xlu0 %624
      %626 = vrot.lane.b32.xlu0 %v618, 96
      %v627 = vpop.permute.xlu0 %626
      %v628 = vrot.slane %v569, 2
      %v629 = vrot.slane %v570, 2
      %v630 = vsel %vm299, %v628, %v629
      %v631 = vrot.slane %v571, 2
      %v632 = vsel %vm299, %v629, %v631
      %v633 = vrot.slane %v573, 2
      %v634 = vrot.slane %v575, 3
      %v635 = vor.u32 %v633, %v634
      %v636 = vrot.slane %v584, 2
      %v637 = vrot.slane %v580, 3
      %v638 = vor.u32 %v636, %v637
      %v639 = vsel %vm305, %v635, %v638
      %v640 = vrot.slane %v592, 2
      %v641 = vrot.slane %v588, 3
      %v642 = vor.u32 %v640, %v641
      %v643 = vsel %vm305, %v638, %v642
      %644 = vrot.lane.b32.xlu0 %v639, 32
      %v645 = vpop.permute.xlu0 %644
      %646 = vrot.lane.b32.xlu0 %v643, 32
      %v647 = vpop.permute.xlu0 %646
      %648 = vrot.lane.b32.xlu0 %v640, 32
      %v649 = vpop.permute.xlu0 %648
      %v650 = vrot.slane %v569, 3
      %v651 = vrot.slane %v570, 3
      %v652 = vsel %vm323, %v650, %v651
      %v653 = vrot.slane %v571, 3
      %v654 = vsel %vm323, %v651, %v653
      %655 = vrot.lane.b32.xlu0 %v652, 64
      %v656 = vpop.permute.xlu0 %655
      %657 = vrot.lane.b32.xlu0 %v654, 64
      %v658 = vpop.permute.xlu0 %657
      %659 = vrot.lane.b32.xlu0 %v653, 64
      %v660 = vpop.permute.xlu0 %659
      %v661 = vrot.slane %v573, 3
      %v662 = vrot.slane %v575, 4
      %v663 = vor.u32 %v661, %v662
      %v664 = vrot.slane %v584, 3
      %v665 = vrot.slane %v580, 4
      %v666 = vor.u32 %v664, %v665
      %v667 = vsel %vm335, %v663, %v666
      %v668 = vrot.slane %v592, 3
      %v669 = vrot.slane %v588, 4
      %v670 = vor.u32 %v668, %v669
      %v671 = vsel %vm335, %v666, %v670
      %672 = vrot.lane.b32.xlu0 %v667, 96
      %v673 = vpop.permute.xlu0 %672
      %674 = vrot.lane.b32.xlu0 %v671, 96
      %v675 = vpop.permute.xlu0 %674
      %676 = vrot.lane.b32.xlu0 %v668, 96
      %v677 = vpop.permute.xlu0 %676
      %v679 = vsel %vm353, %v569, %v595
      %v681 = vsel %vm353, %v570, %v597
      %v683 = vsel %vm353, %v571, %v599
      %v685 = vsel %vm360, %v679, %v606
      %v687 = vsel %vm360, %v681, %v608
      %v689 = vsel %vm360, %v683, %v610
      %v691 = vsel %vm367, %v685, %v623
      %v693 = vsel %vm367, %v687, %v625
      %v695 = vsel %vm367, %v689, %v627
      %v698 = vsel %vm353, %v630, %v645
      %v701 = vsel %vm353, %v632, %v647
      %v704 = vsel %vm353, %v631, %v649
      %v706 = vsel %vm360, %v698, %v656
      %v708 = vsel %vm360, %v701, %v658
      %v710 = vsel %vm360, %v704, %v660
      %v712 = vsel %vm367, %v706, %v673
      %v714 = vsel %vm367, %v708, %v675
      %v716 = vsel %vm367, %v710, %v677
      %v722 = vunpack.c.l.b16 %v222
      %v723 = vunpack.c.l.b16 %v223
      %v724 = vunpack.c.l.b16 %v224
      %v725 = vunpack.c.l.b16 %v225
      %v726 = vunpack.c.l.b16 %v226
      %v727 = vpack.c.b16 %v723, %v722
      %v728 = vpack.c.b16 %v725, %v724
      %v729 = vpack.c.b16 %v726, %v726
      %v731 = vshrl.u32 %v727, 16
      %v733 = vshll.u32 %v727, 16
      %v735 = vrot.slane %v733, 1
      %v736 = vor.u32 %v731, %v735
      %v738 = vshll.u32 %v728, 16
      %v740 = vrot.slane %v738, 1
      %v741 = vsel %vm240, %v736, %v740
      %v742 = vshrl.u32 %v728, 16
      %v744 = vor.u32 %v742, %v740
      %v746 = vshll.u32 %v729, 16
      %v748 = vrot.slane %v746, 1
      %v749 = vsel %vm240, %v744, %v748
      %v750 = vshrl.u32 %v729, 16
      %752 = vrot.lane.b32.xlu0 %v741, 32
      %v753 = vpop.permute.xlu0 %752
      %754 = vrot.lane.b32.xlu0 %v749, 32
      %v755 = vpop.permute.xlu0 %754
      %756 = vrot.lane.b32.xlu0 %v750, 32
      %v757 = vpop.permute.xlu0 %756
      %v758 = vrot.slane %v727, 1
      %v759 = vrot.slane %v728, 1
      %v760 = vsel %vm269, %v758, %v759
      %v761 = vrot.slane %v729, 1
      %v762 = vsel %vm269, %v759, %v761
      %763 = vrot.lane.b32.xlu0 %v760, 64
      %v764 = vpop.permute.xlu0 %763
      %765 = vrot.lane.b32.xlu0 %v762, 64
      %v766 = vpop.permute.xlu0 %765
      %767 = vrot.lane.b32.xlu0 %v761, 64
      %v768 = vpop.permute.xlu0 %767
      %v769 = vrot.slane %v731, 1
      %v770 = vrot.slane %v733, 2
      %v771 = vor.u32 %v769, %v770
      %v772 = vrot.slane %v742, 1
      %v773 = vrot.slane %v738, 2
      %v774 = vor.u32 %v772, %v773
      %v775 = vsel %vm281, %v771, %v774
      %v776 = vrot.slane %v750, 1
      %v777 = vrot.slane %v746, 2
      %v778 = vor.u32 %v776, %v777
      %v779 = vsel %vm281, %v774, %v778
      %780 = vrot.lane.b32.xlu0 %v775, 96
      %v781 = vpop.permute.xlu0 %780
      %782 = vrot.lane.b32.xlu0 %v779, 96
      %v783 = vpop.permute.xlu0 %782
      %784 = vrot.lane.b32.xlu0 %v776, 96
      %v785 = vpop.permute.xlu0 %784
      %v786 = vrot.slane %v727, 2
      %v787 = vrot.slane %v728, 2
      %v788 = vsel %vm299, %v786, %v787
      %v789 = vrot.slane %v729, 2
      %v790 = vsel %vm299, %v787, %v789
      %v791 = vrot.slane %v731, 2
      %v792 = vrot.slane %v733, 3
      %v793 = vor.u32 %v791, %v792
      %v794 = vrot.slane %v742, 2
      %v795 = vrot.slane %v738, 3
      %v796 = vor.u32 %v794, %v795
      %v797 = vsel %vm305, %v793, %v796
      %v798 = vrot.slane %v750, 2
      %v799 = vrot.slane %v746, 3
      %v800 = vor.u32 %v798, %v799
      %v801 = vsel %vm305, %v796, %v800
      %802 = vrot.lane.b32.xlu0 %v797, 32
      %v803 = vpop.permute.xlu0 %802
      %804 = vrot.lane.b32.xlu0 %v801, 32
      %v805 = vpop.permute.xlu0 %804
      %806 = vrot.lane.b32.xlu0 %v798, 32
      %v807 = vpop.permute.xlu0 %806
      %v808 = vrot.slane %v727, 3
      %v809 = vrot.slane %v728, 3
      %v810 = vsel %vm323, %v808, %v809
      %v811 = vrot.slane %v729, 3
      %v812 = vsel %vm323, %v809, %v811
      %813 = vrot.lane.b32.xlu0 %v810, 64
      %v814 = vpop.permute.xlu0 %813
      %815 = vrot.lane.b32.xlu0 %v812, 64
      %v816 = vpop.permute.xlu0 %815
      %817 = vrot.lane.b32.xlu0 %v811, 64
      %v818 = vpop.permute.xlu0 %817
      %v819 = vrot.slane %v731, 3
      %v820 = vrot.slane %v733, 4
      %v821 = vor.u32 %v819, %v820
      %v822 = vrot.slane %v742, 3
      %v823 = vrot.slane %v738, 4
      %v824 = vor.u32 %v822, %v823
      %v825 = vsel %vm335, %v821, %v824
      %v826 = vrot.slane %v750, 3
      %v827 = vrot.slane %v746, 4
      %v828 = vor.u32 %v826, %v827
      %v829 = vsel %vm335, %v824, %v828
      %830 = vrot.lane.b32.xlu0 %v825, 96
      %v831 = vpop.permute.xlu0 %830
      %832 = vrot.lane.b32.xlu0 %v829, 96
      %v833 = vpop.permute.xlu0 %832
      %834 = vrot.lane.b32.xlu0 %v826, 96
      %v835 = vpop.permute.xlu0 %834
      %v837 = vsel %vm353, %v727, %v753
      %v839 = vsel %vm353, %v728, %v755
      %v841 = vsel %vm353, %v729, %v757
      %v843 = vsel %vm360, %v837, %v764
      %v845 = vsel %vm360, %v839, %v766
      %v847 = vsel %vm360, %v841, %v768
      %v849 = vsel %vm367, %v843, %v781
      %v851 = vsel %vm367, %v845, %v783
      %v853 = vsel %vm367, %v847, %v785
      %v856 = vsel %vm353, %v788, %v803
      %v859 = vsel %vm353, %v790, %v805
      %v862 = vsel %vm353, %v789, %v807
      %v864 = vsel %vm360, %v856, %v814
      %v866 = vsel %vm360, %v859, %v816
      %v868 = vsel %vm360, %v862, %v818
      %v870 = vsel %vm367, %v864, %v831
      %v872 = vsel %vm367, %v866, %v833
      %v874 = vsel %vm367, %v868, %v835
      %vm875 = vsmask.f32 256
      %v876 = vshrl.u32 %v533, 16
      %v878 = vrot.slane %v876, 7
      %v879 = vshll.u32 %v533, 16
      %v881 = vor.u32 %v878, %v879
      %v882 = vshrl.u32 %v554, 16
      %v884 = vrot.slane %v882, 7
      %v885 = vshll.u32 %v554, 16
      %v887 = vor.u32 %v884, %v885
      %v888 = vshrl.u32 %v535, 16
      %v890 = vrot.slane %v888, 7
      %v891 = vshll.u32 %v535, 16
      %v893 = vor.u32 %v890, %v891
      %v894 = vsel %vm875, %v878, %v893
      %v895 = vshrl.u32 %v556, 16
      %v897 = vrot.slane %v895, 7
      %v898 = vshll.u32 %v556, 16
      %v900 = vor.u32 %v897, %v898
      %v901 = vsel %vm875, %v884, %v900
      %v902 = vshll.u32 %v537, 16
      %v904 = vsel %vm875, %v890, %v902
      %v905 = vshll.u32 %v558, 16
      %v907 = vsel %vm875, %v897, %v905
      %vm918 = vcmask 1040384
      %v919 = vrot.slane %v691, 7
      %v920 = vrot.slane %v712, 7
      %v921 = vrot.slane %v693, 7
      %v922 = vsel %vm918, %v919, %v921
      %v923 = vrot.slane %v714, 7
      %v924 = vsel %vm918, %v920, %v923
      %v925 = vrot.slane %v695, 7
      %v926 = vsel %vm918, %v921, %v925
      %v927 = vrot.slane %v716, 7
      %v928 = vsel %vm918, %v923, %v927
      %vm933 = vsmask.f32 1280
      %v934 = vshrl.u32 %v849, 16
      %v936 = vrot.slane %v934, 6
      %v937 = vshll.u32 %v849, 16
      %v939 = vrot.slane %v937, 7
      %v940 = vor.u32 %v936, %v939
      %v941 = vshrl.u32 %v870, 16
      %v943 = vrot.slane %v941, 6
      %v944 = vshll.u32 %v870, 16
      %v946 = vrot.slane %v944, 7
      %v947 = vor.u32 %v943, %v946
      %v948 = vshrl.u32 %v851, 16
      %v950 = vrot.slane %v948, 6
      %v951 = vshll.u32 %v851, 16
      %v953 = vrot.slane %v951, 7
      %v954 = vor.u32 %v950, %v953
      %v955 = vsel %vm933, %v940, %v954
      %v956 = vshrl.u32 %v872, 16
      %v958 = vrot.slane %v956, 6
      %v959 = vshll.u32 %v872, 16
      %v961 = vrot.slane %v959, 7
      %v962 = vor.u32 %v958, %v961
      %v963 = vsel %vm933, %v947, %v962
      %v964 = vshll.u32 %v853, 16
      %v966 = vrot.slane %v964, 7
      %v967 = vsel %vm933, %v954, %v966
      %v968 = vshll.u32 %v874, 16
      %v970 = vrot.slane %v968, 7
      %v971 = vsel %vm933, %v962, %v970
      %vm976 = vmand %vm918, %vm875
      %v977 = vsel %vm976, %v375, %v881
      %v978 = vsel %vm976, %v399, %v887
      %vm979 = vcmask 1040384
      %v982 = vsel %vm979, %v904, %v919
      %v986 = vsel %vm979, %v907, %v920
      %vm988 = vcmask 1041408
      %vm989 = vmand %vm988, %vm933
      %v990 = vsel %vm989, %v926, %v940
      %v991 = vsel %vm989, %v928, %v947
      %vm992 = vcmask 1041408
      %v995 = vsel %vm992, %v967, 0
      %v998 = vsel %vm992, %v971, 0
      %v1000 = vld [vmem:[%s1] sm:$0xff]
      %v1001 = vld [vmem:[%s1 + $0x8] sm:$0xff]
      %v1002 = vld [vmem:[%s1 + $0x10] sm:$0xff]
      %v1003 = vld [vmem:[%s1 + $0x18] sm:$0xff]
      %v1004 = vld [vmem:[%s1 + $0x20] sm:$0xff]
      %v1005 = vld [vmem:[%s1 + $0x28] sm:$0xff]
      %v1006 = vld [vmem:[%s1 + $0x30] sm:$0xff]
      %v1007 = vld [vmem:[%s1 + $0x38] sm:$0xff]
      %v1008 = vld [vmem:[%s1 + $0x40] sm:$0xff]
      %v1009 = vld [vmem:[%s1 + $0x48] sm:$0xff]
      %v1010 = vld [vmem:[%s1 + $0x50] sm:$0xff]
      %v1011 = vld [vmem:[%s1 + $0x58] sm:$0xff]
      %v1012 = vld [vmem:[%s1 + $0x60] sm:$0xff]
      %v1013 = vld [vmem:[%s1 + $0x68] sm:$0xff]
      %v1014 = vld [vmem:[%s1 + $0x70] sm:$0xff]
      %v1015 = vld [vmem:[%s1 + $0x78] sm:$0xff]
      %v1016 = vld [vmem:[%s1 + $0x80] sm:$0xff]
      %v1017 = vld [vmem:[%s1 + $0x88] sm:$0xff]
      %v1018 = vld [vmem:[%s1 + $0x90] sm:$0xff]
      %v1019 = vld [vmem:[%s1 + $0x98] sm:$0xff]
      %v1020 = vld [vmem:[%s1 + $0xa0] sm:$0xff]
      %v1021 = vld [vmem:[%s1 + $0xa8] sm:$0xff]
      %v1022 = vld [vmem:[%s1 + $0xb0] sm:$0xff]
      %v1023 = vld [vmem:[%s1 + $0xb8] sm:$0xff]
      %v1024 = vld [vmem:[%s1 + $0xc0] sm:$0xff]
      %v1025 = vld [vmem:[%s1 + $0xc8] sm:$0xff]
      %v1026 = vld [vmem:[%s1 + $0xd0] sm:$0xff]
      %v1027 = vld [vmem:[%s1 + $0xd8] sm:$0xff]
      %v1028 = vld [vmem:[%s1 + $0xe0] sm:$0xff]
      %v1029 = vld [vmem:[%s1 + $0xe8] sm:$0xff]
      %v1030 = vld [vmem:[%s1 + $0xf0] sm:$0xff]
      %v1031 = vld [vmem:[%s1 + $0xf8] sm:$0xff]
      %v1032 = vld [vmem:[%s2] sm:$0x3]
      %v1034 = vlaneseq
      %v1035 = vshrl.u32 %v1034, 7
      %v1036 = vsub.s32 0, %v1035
      %v1037 = vrot.slane %v1032, %v1036
      %v1038 = vlaneseq
      %v1039 = vshrl.u32 %v1038, 7
      %v1040 = vsub.s32 1, %v1039
      %v1041 = vrot.slane %v1032, %v1040
      %v1076 = vunpack.c.l.b16 %v1000
      %v1077 = vunpack.c.h.b16 %v1000
      %v1078 = vunpack.c.l.b16 %v1001
      %v1079 = vunpack.c.h.b16 %v1001
      %v1080 = vunpack.c.l.b16 %v1002
      %v1081 = vunpack.c.h.b16 %v1002
      %v1082 = vunpack.c.l.b16 %v1003
      %v1083 = vunpack.c.h.b16 %v1003
      %v1084 = vunpack.c.l.b16 %v1004
      %v1085 = vunpack.c.h.b16 %v1004
      %v1086 = vunpack.c.l.b16 %v1005
      %v1087 = vunpack.c.h.b16 %v1005
      %v1088 = vunpack.c.l.b16 %v1006
      %v1089 = vunpack.c.h.b16 %v1006
      %v1090 = vunpack.c.l.b16 %v1007
      %v1091 = vunpack.c.h.b16 %v1007
      %v1092 = vunpack.c.l.b16 %v1008
      %v1093 = vunpack.c.h.b16 %v1008
      %v1094 = vunpack.c.l.b16 %v1009
      %v1095 = vunpack.c.h.b16 %v1009
      %v1096 = vunpack.c.l.b16 %v1010
      %v1097 = vunpack.c.h.b16 %v1010
      %v1098 = vunpack.c.l.b16 %v1011
      %v1099 = vunpack.c.h.b16 %v1011
      %v1100 = vunpack.c.l.b16 %v1012
      %v1101 = vunpack.c.h.b16 %v1012
      %v1102 = vunpack.c.l.b16 %v1013
      %v1103 = vunpack.c.h.b16 %v1013
      %v1104 = vunpack.c.l.b16 %v1014
      %v1105 = vunpack.c.h.b16 %v1014
      %v1106 = vunpack.c.l.b16 %v1015
      %v1107 = vunpack.c.h.b16 %v1015
      %v1108 = vunpack.c.l.b16 %v1016
      %v1109 = vunpack.c.h.b16 %v1016
      %v1110 = vunpack.c.l.b16 %v1017
      %v1111 = vunpack.c.h.b16 %v1017
      %v1112 = vunpack.c.l.b16 %v1018
      %v1113 = vunpack.c.h.b16 %v1018
      %v1114 = vunpack.c.l.b16 %v1019
      %v1115 = vunpack.c.h.b16 %v1019
      %v1116 = vunpack.c.l.b16 %v1020
      %v1117 = vunpack.c.h.b16 %v1020
      %v1118 = vunpack.c.l.b16 %v1021
      %v1119 = vunpack.c.h.b16 %v1021
      %v1120 = vunpack.c.l.b16 %v1022
      %v1121 = vunpack.c.h.b16 %v1022
      %v1122 = vunpack.c.l.b16 %v1023
      %v1123 = vunpack.c.h.b16 %v1023
      %v1124 = vunpack.c.l.b16 %v1024
      %v1125 = vunpack.c.h.b16 %v1024
      %v1126 = vunpack.c.l.b16 %v1025
      %v1127 = vunpack.c.h.b16 %v1025
      %v1128 = vunpack.c.l.b16 %v1026
      %v1129 = vunpack.c.h.b16 %v1026
      %v1130 = vunpack.c.l.b16 %v1027
      %v1131 = vunpack.c.h.b16 %v1027
      %v1132 = vunpack.c.l.b16 %v1028
      %v1133 = vunpack.c.h.b16 %v1028
      %v1134 = vunpack.c.l.b16 %v1029
      %v1135 = vunpack.c.h.b16 %v1029
      %v1136 = vunpack.c.l.b16 %v1030
      %v1137 = vunpack.c.h.b16 %v1030
      %v1138 = vunpack.c.l.b16 %v1031
      %v1139 = vunpack.c.h.b16 %v1031
      %v1140 = vpack.c.b16 %v1078, %v1076
      %v1141 = vpack.c.b16 %v1079, %v1077
      %v1142 = vpack.c.b16 %v1082, %v1080
      %v1143 = vpack.c.b16 %v1083, %v1081
      %v1144 = vpack.c.b16 %v1086, %v1084
      %v1145 = vpack.c.b16 %v1087, %v1085
      %v1146 = vpack.c.b16 %v1090, %v1088
      %v1147 = vpack.c.b16 %v1091, %v1089
      %v1148 = vpack.c.b16 %v1094, %v1092
      %v1149 = vpack.c.b16 %v1095, %v1093
      %v1150 = vpack.c.b16 %v1098, %v1096
      %v1151 = vpack.c.b16 %v1099, %v1097
      %v1152 = vpack.c.b16 %v1102, %v1100
      %v1153 = vpack.c.b16 %v1103, %v1101
      %v1154 = vpack.c.b16 %v1106, %v1104
      %v1155 = vpack.c.b16 %v1107, %v1105
      %v1156 = vpack.c.b16 %v1110, %v1108
      %v1157 = vpack.c.b16 %v1111, %v1109
      %v1158 = vpack.c.b16 %v1114, %v1112
      %v1159 = vpack.c.b16 %v1115, %v1113
      %v1160 = vpack.c.b16 %v1118, %v1116
      %v1161 = vpack.c.b16 %v1119, %v1117
      %v1162 = vpack.c.b16 %v1122, %v1120
      %v1163 = vpack.c.b16 %v1123, %v1121
      %v1164 = vpack.c.b16 %v1126, %v1124
      %v1165 = vpack.c.b16 %v1127, %v1125
      %v1166 = vpack.c.b16 %v1130, %v1128
      %v1167 = vpack.c.b16 %v1131, %v1129
      %v1168 = vpack.c.b16 %v1134, %v1132
      %v1169 = vpack.c.b16 %v1135, %v1133
      %v1170 = vpack.c.b16 %v1138, %v1136
      %v1171 = vpack.c.b16 %v1139, %v1137
      %1204 = vmatprep.subr.bf16.mxu0 %v1141
      %1205 = vmatpush1.bf16.msra.mxu0 %v1140
      %1206 = vmatprep.subr.bf16.mxu0 %v1143
      %1207 = vmatpush1.bf16.msra.mxu0 %v1142
      %1208 = vmatprep.subr.bf16.mxu0 %v1145
      %1209 = vmatpush1.bf16.msra.mxu0 %v1144
      %1210 = vmatprep.subr.bf16.mxu0 %v1147
      %1211 = vmatpush1.bf16.msra.mxu0 %v1146
      %1212 = vmatprep.subr.bf16.mxu0 %v1149
      %1213 = vmatpush1.bf16.msra.mxu0 %v1148
      %1214 = vmatprep.subr.bf16.mxu0 %v1151
      %1215 = vmatpush1.bf16.msra.mxu0 %v1150
      %1216 = vmatprep.subr.bf16.mxu0 %v1153
      %1217 = vmatpush1.bf16.msra.mxu0 %v1152
      %1218 = vmatprep.subr.bf16.mxu0 %v1155
      %1219 = vmatpush1.bf16.msra.mxu0 %v1154
      %1220 = vmatprep.subr.bf16.mxu0 %v1157
      %1221 = vmatpush1.bf16.msra.mxu0 %v1156
      %1222 = vmatprep.subr.bf16.mxu0 %v1159
      %1223 = vmatpush1.bf16.msra.mxu0 %v1158
      %1224 = vmatprep.subr.bf16.mxu0 %v1161
      %1225 = vmatpush1.bf16.msra.mxu0 %v1160
      %1226 = vmatprep.subr.bf16.mxu0 %v1163
      %1227 = vmatpush1.bf16.msra.mxu0 %v1162
      %1228 = vmatprep.subr.bf16.mxu0 %v1165
      %1229 = vmatpush1.bf16.msra.mxu0 %v1164
      %1230 = vmatprep.subr.bf16.mxu0 %v1167
      %1231 = vmatpush1.bf16.msra.mxu0 %v1166
      %1232 = vmatprep.subr.bf16.mxu0 %v1169
      %1233 = vmatpush1.bf16.msra.mxu0 %v1168
      %1234 = vmatprep.subr.bf16.mxu0 %v1171
      %1235 = vmatpush1.bf16.msra.mxu0 %v1170
      %1236 = vmatprep.mubr.bf16.mxu0 %v393
      %1237 = vmatmul.mubr.bf16.gmra.mrb[0].mxu0 %v369
      %v1238 = vpop.f32.mrb[0].mxu0
      %v1239 = vadd.f32 %v1037, %v1238
      %v1240 = vpop.f32.mrb[0].mxu0
      %v1241 = vadd.f32 %v1041, %v1240
      %v1242 = vpop.f32.mrb[0].mxu0
      %v1243 = vadd.f32 %v1037, %v1242
      %v1244 = vpop.f32.mrb[0].mxu0
      %v1245 = vadd.f32 %v1041, %v1244
      %1246 = vmatprep.mubr.bf16.mxu0 %v396
      %1247 = vmatmul.mubr.bf16.gmra.mrb[0].mxu0 %v372
      %v1248 = vpop.f32.mrb[0].mxu0
      %v1249 = vadd.f32 %v1037, %v1248
      %v1250 = vpop.f32.mrb[0].mxu0
      %v1251 = vadd.f32 %v1041, %v1250
      %v1252 = vpop.f32.mrb[0].mxu0
      %v1253 = vadd.f32 %v1037, %v1252
      %v1254 = vpop.f32.mrb[0].mxu0
      %v1255 = vadd.f32 %v1041, %v1254
      %1256 = vmatprep.mubr.bf16.mxu0 %v978
      %1257 = vmatmul.mubr.bf16.gmra.mrb[0].mxu0 %v977
      %v1258 = vpop.f32.mrb[0].mxu0
      %v1259 = vadd.f32 %v1037, %v1258
      %v1260 = vpop.f32.mrb[0].mxu0
      %v1261 = vadd.f32 %v1041, %v1260
      %v1262 = vpop.f32.mrb[0].mxu0
      %v1263 = vadd.f32 %v1037, %v1262
      %v1264 = vpop.f32.mrb[0].mxu0
      %v1265 = vadd.f32 %v1041, %v1264
      %1266 = vmatprep.mubr.bf16.mxu0 %v901
      %1267 = vmatmul.mubr.bf16.gmra.mrb[0].mxu0 %v894
      %v1268 = vpop.f32.mrb[0].mxu0
      %v1269 = vadd.f32 %v1037, %v1268
      %v1270 = vpop.f32.mrb[0].mxu0
      %v1271 = vadd.f32 %v1041, %v1270
      %v1272 = vpop.f32.mrb[0].mxu0
      %v1273 = vadd.f32 %v1037, %v1272
      %v1274 = vpop.f32.mrb[0].mxu0
      %v1275 = vadd.f32 %v1041, %v1274
      %1276 = vmatprep.mubr.bf16.mxu0 %v986
      %1277 = vmatmul.mubr.bf16.gmra.mrb[0].mxu0 %v982
      %v1278 = vpop.f32.mrb[0].mxu0
      %v1279 = vadd.f32 %v1037, %v1278
      %v1280 = vpop.f32.mrb[0].mxu0
      %v1281 = vadd.f32 %v1041, %v1280
      %v1282 = vpop.f32.mrb[0].mxu0
      %v1283 = vadd.f32 %v1037, %v1282
      %v1284 = vpop.f32.mrb[0].mxu0
      %v1285 = vadd.f32 %v1041, %v1284
      %1286 = vmatprep.mubr.bf16.mxu0 %v924
      %1287 = vmatmul.mubr.bf16.gmra.mrb[0].mxu0 %v922
      %v1288 = vpop.f32.mrb[0].mxu0
      %v1289 = vadd.f32 %v1037, %v1288
      %v1290 = vpop.f32.mrb[0].mxu0
      %v1291 = vadd.f32 %v1041, %v1290
      %v1292 = vpop.f32.mrb[0].mxu0
      %v1293 = vadd.f32 %v1037, %v1292
      %v1294 = vpop.f32.mrb[0].mxu0
      %v1295 = vadd.f32 %v1041, %v1294
      %1296 = vmatprep.mubr.bf16.mxu0 %v991
      %1297 = vmatmul.mubr.bf16.gmra.mrb[0].mxu0 %v990
      %v1298 = vpop.f32.mrb[0].mxu0
      %v1299 = vadd.f32 %v1037, %v1298
      %v1300 = vpop.f32.mrb[0].mxu0
      %v1301 = vadd.f32 %v1041, %v1300
      %v1302 = vpop.f32.mrb[0].mxu0
      %v1303 = vadd.f32 %v1037, %v1302
      %v1304 = vpop.f32.mrb[0].mxu0
      %v1305 = vadd.f32 %v1041, %v1304
      %1306 = vmatprep.mubr.bf16.mxu0 %v963
      %1307 = vmatmul.mubr.bf16.gmra.mrb[0].mxu0 %v955
      %v1308 = vpop.f32.mrb[0].mxu0
      %v1309 = vadd.f32 %v1037, %v1308
      %v1310 = vpop.f32.mrb[0].mxu0
      %v1311 = vadd.f32 %v1041, %v1310
      %v1312 = vpop.f32.mrb[0].mxu0
      %v1313 = vadd.f32 %v1037, %v1312
      %v1314 = vpop.f32.mrb[0].mxu0
      %v1315 = vadd.f32 %v1041, %v1314
      %1316 = vmatprep.mubr.bf16.mxu0 %v998
      %1317 = vmatmul.mubr.bf16.gmra.mrb[0].mxu0 %v995
      %v1318 = vpop.f32.mrb[0].mxu0
      %v1319 = vadd.f32 %v1037, %v1318
      %v1320 = vpop.f32.mrb[0].mxu0
      %v1321 = vadd.f32 %v1041, %v1320
      %v1322 = vpop.f32.mrb[0].mxu0
      %v1323 = vpop.f32.mrb[0].mxu0
      %1324 = vdwg.mxu0
      %v1325 = vpack.c.bf16 %v1243, %v1239
      %v1326 = vpack.c.bf16 %v1245, %v1241
      %v1327 = vpack.c.bf16 %v1253, %v1249
      %v1328 = vpack.c.bf16 %v1255, %v1251
      %v1329 = vpack.c.bf16 %v1263, %v1259
      %v1330 = vpack.c.bf16 %v1265, %v1261
      %v1331 = vpack.c.bf16 %v1273, %v1269
      %v1332 = vpack.c.bf16 %v1275, %v1271
      %v1333 = vpack.c.bf16 %v1283, %v1279
      %v1334 = vpack.c.bf16 %v1285, %v1281
      %v1335 = vpack.c.bf16 %v1293, %v1289
      %v1336 = vpack.c.bf16 %v1295, %v1291
      %v1337 = vpack.c.bf16 %v1303, %v1299
      %v1338 = vpack.c.bf16 %v1305, %v1301
      %v1339 = vpack.c.bf16 %v1313, %v1309
      %v1340 = vpack.c.bf16 %v1315, %v1311
      %v1341 = vpack.c.bf16 %v1319, %v1319
      %v1342 = vpack.c.bf16 %v1321, %v1321
      %v1343 = vld [vmem:[%s3] sm:$0xff]
      %v1344 = vld [vmem:[%s3 + $0x8] sm:$0xff]
      %v1345 = vld [vmem:[%s3 + $0x10] sm:$0xff]
      %v1346 = vld [vmem:[%s3 + $0x18] sm:$0xff]
      %v1347 = vld [vmem:[%s3 + $0x20] sm:$0xff]
      %v1348 = vld [vmem:[%s3 + $0x28] sm:$0xff]
      %v1349 = vld [vmem:[%s3 + $0x30] sm:$0xff]
      %v1350 = vld [vmem:[%s3 + $0x38] sm:$0xff]
      %v1351 = vld [vmem:[%s3 + $0x40] sm:$0xff]
      %v1352 = vld [vmem:[%s3 + $0x48] sm:$0xff]
      %v1353 = vld [vmem:[%s3 + $0x50] sm:$0xff]
      %v1354 = vld [vmem:[%s3 + $0x58] sm:$0xff]
      %v1355 = vld [vmem:[%s3 + $0x60] sm:$0xff]
      %v1356 = vld [vmem:[%s3 + $0x68] sm:$0xff]
      %v1357 = vld [vmem:[%s3 + $0x70] sm:$0xff]
      %v1358 = vld [vmem:[%s3 + $0x78] sm:$0xff]
      %v1359 = vld [vmem:[%s3 + $0x80] sm:$0xff]
      %v1360 = vld [vmem:[%s3 + $0x88] sm:$0xff]
      %v1361 = vld [vmem:[%s3 + $0x90] sm:$0xff]
      %v1362 = vld [vmem:[%s3 + $0x98] sm:$0xff]
      %v1363 = vld [vmem:[%s3 + $0xa0] sm:$0xff]
      %v1364 = vld [vmem:[%s3 + $0xa8] sm:$0xff]
      %v1365 = vld [vmem:[%s3 + $0xb0] sm:$0xff]
      %v1366 = vld [vmem:[%s3 + $0xb8] sm:$0xff]
      %v1367 = vld [vmem:[%s3 + $0xc0] sm:$0xff]
      %v1368 = vld [vmem:[%s3 + $0xc8] sm:$0xff]
      %v1369 = vld [vmem:[%s3 + $0xd0] sm:$0xff]
      %v1370 = vld [vmem:[%s3 + $0xd8] sm:$0xff]
      %v1371 = vld [vmem:[%s3 + $0xe0] sm:$0xff]
      %v1372 = vld [vmem:[%s3 + $0xe8] sm:$0xff]
      %v1373 = vld [vmem:[%s3 + $0xf0] sm:$0xff]
      %v1374 = vld [vmem:[%s3 + $0xf8] sm:$0xff]
      %v1407 = vunpack.c.l.b16 %v1343
      %v1408 = vunpack.c.h.b16 %v1343
      %v1409 = vunpack.c.l.b16 %v1344
      %v1410 = vunpack.c.h.b16 %v1344
      %v1411 = vunpack.c.l.b16 %v1345
      %v1412 = vunpack.c.h.b16 %v1345
      %v1413 = vunpack.c.l.b16 %v1346
      %v1414 = vunpack.c.h.b16 %v1346
      %v1415 = vunpack.c.l.b16 %v1347
      %v1416 = vunpack.c.h.b16 %v1347
      %v1417 = vunpack.c.l.b16 %v1348
      %v1418 = vunpack.c.h.b16 %v1348
      %v1419 = vunpack.c.l.b16 %v1349
      %v1420 = vunpack.c.h.b16 %v1349
      %v1421 = vunpack.c.l.b16 %v1350
      %v1422 = vunpack.c.h.b16 %v1350
      %v1423 = vunpack.c.l.b16 %v1351
      %v1424 = vunpack.c.h.b16 %v1351
      %v1425 = vunpack.c.l.b16 %v1352
      %v1426 = vunpack.c.h.b16 %v1352
      %v1427 = vunpack.c.l.b16 %v1353
      %v1428 = vunpack.c.h.b16 %v1353
      %v1429 = vunpack.c.l.b16 %v1354
      %v1430 = vunpack.c.h.b16 %v1354
      %v1431 = vunpack.c.l.b16 %v1355
      %v1432 = vunpack.c.h.b16 %v1355
      %v1433 = vunpack.c.l.b16 %v1356
      %v1434 = vunpack.c.h.b16 %v1356
      %v1435 = vunpack.c.l.b16 %v1357
      %v1436 = vunpack.c.h.b16 %v1357
      %v1437 = vunpack.c.l.b16 %v1358
      %v1438 = vunpack.c.h.b16 %v1358
      %v1439 = vunpack.c.l.b16 %v1359
      %v1440 = vunpack.c.h.b16 %v1359
      %v1441 = vunpack.c.l.b16 %v1360
      %v1442 = vunpack.c.h.b16 %v1360
      %v1443 = vunpack.c.l.b16 %v1361
      %v1444 = vunpack.c.h.b16 %v1361
      %v1445 = vunpack.c.l.b16 %v1362
      %v1446 = vunpack.c.h.b16 %v1362
      %v1447 = vunpack.c.l.b16 %v1363
      %v1448 = vunpack.c.h.b16 %v1363
      %v1449 = vunpack.c.l.b16 %v1364
      %v1450 = vunpack.c.h.b16 %v1364
      %v1451 = vunpack.c.l.b16 %v1365
      %v1452 = vunpack.c.h.b16 %v1365
      %v1453 = vunpack.c.l.b16 %v1366
      %v1454 = vunpack.c.h.b16 %v1366
      %v1455 = vunpack.c.l.b16 %v1367
      %v1456 = vunpack.c.h.b16 %v1367
      %v1457 = vunpack.c.l.b16 %v1368
      %v1458 = vunpack.c.h.b16 %v1368
      %v1459 = vunpack.c.l.b16 %v1369
      %v1460 = vunpack.c.h.b16 %v1369
      %v1461 = vunpack.c.l.b16 %v1370
      %v1462 = vunpack.c.h.b16 %v1370
      %v1463 = vunpack.c.l.b16 %v1371
      %v1464 = vunpack.c.h.b16 %v1371
      %v1465 = vunpack.c.l.b16 %v1372
      %v1466 = vunpack.c.h.b16 %v1372
      %v1467 = vunpack.c.l.b16 %v1373
      %v1468 = vunpack.c.h.b16 %v1373
      %v1469 = vunpack.c.l.b16 %v1374
      %v1470 = vunpack.c.h.b16 %v1374
      %v1471 = vpack.c.b16 %v1409, %v1407
      %v1472 = vpack.c.b16 %v1410, %v1408
      %v1473 = vpack.c.b16 %v1413, %v1411
      %v1474 = vpack.c.b16 %v1414, %v1412
      %v1475 = vpack.c.b16 %v1417, %v1415
      %v1476 = vpack.c.b16 %v1418, %v1416
      %v1477 = vpack.c.b16 %v1421, %v1419
      %v1478 = vpack.c.b16 %v1422, %v1420
      %v1479 = vpack.c.b16 %v1425, %v1423
      %v1480 = vpack.c.b16 %v1426, %v1424
      %v1481 = vpack.c.b16 %v1429, %v1427
      %v1482 = vpack.c.b16 %v1430, %v1428
      %v1483 = vpack.c.b16 %v1433, %v1431
      %v1484 = vpack.c.b16 %v1434, %v1432
      %v1485 = vpack.c.b16 %v1437, %v1435
      %v1486 = vpack.c.b16 %v1438, %v1436
      %v1487 = vpack.c.b16 %v1441, %v1439
      %v1488 = vpack.c.b16 %v1442, %v1440
      %v1489 = vpack.c.b16 %v1445, %v1443
      %v1490 = vpack.c.b16 %v1446, %v1444
      %v1491 = vpack.c.b16 %v1449, %v1447
      %v1492 = vpack.c.b16 %v1450, %v1448
      %v1493 = vpack.c.b16 %v1453, %v1451
      %v1494 = vpack.c.b16 %v1454, %v1452
      %v1495 = vpack.c.b16 %v1457, %v1455
      %v1496 = vpack.c.b16 %v1458, %v1456
      %v1497 = vpack.c.b16 %v1461, %v1459
      %v1498 = vpack.c.b16 %v1462, %v1460
      %v1499 = vpack.c.b16 %v1465, %v1463
      %v1500 = vpack.c.b16 %v1466, %v1464
      %v1501 = vpack.c.b16 %v1469, %v1467
      %v1502 = vpack.c.b16 %v1470, %v1468
      %1535 = vmatprep.subr.bf16.mxu0 %v1472
      %1536 = vmatpush1.bf16.msra.mxu0 %v1471
      %1537 = vmatprep.subr.bf16.mxu0 %v1474
      %1538 = vmatpush1.bf16.msra.mxu0 %v1473
      %1539 = vmatprep.subr.bf16.mxu0 %v1476
      %1540 = vmatpush1.bf16.msra.mxu0 %v1475
      %1541 = vmatprep.subr.bf16.mxu0 %v1478
      %1542 = vmatpush1.bf16.msra.mxu0 %v1477
      %1543 = vmatprep.subr.bf16.mxu0 %v1480
      %1544 = vmatpush1.bf16.msra.mxu0 %v1479
      %1545 = vmatprep.subr.bf16.mxu0 %v1482
      %1546 = vmatpush1.bf16.msra.mxu0 %v1481
      %1547 = vmatprep.subr.bf16.mxu0 %v1484
      %1548 = vmatpush1.bf16.msra.mxu0 %v1483
      %1549 = vmatprep.subr.bf16.mxu0 %v1486
      %1550 = vmatpush1.bf16.msra.mxu0 %v1485
      %1551 = vmatprep.subr.bf16.mxu0 %v1488
      %1552 = vmatpush1.bf16.msra.mxu0 %v1487
      %1553 = vmatprep.subr.bf16.mxu0 %v1490
      %1554 = vmatpush1.bf16.msra.mxu0 %v1489
      %1555 = vmatprep.subr.bf16.mxu0 %v1492
      %1556 = vmatpush1.bf16.msra.mxu0 %v1491
      %1557 = vmatprep.subr.bf16.mxu0 %v1494
      %1558 = vmatpush1.bf16.msra.mxu0 %v1493
      %1559 = vmatprep.subr.bf16.mxu0 %v1496
      %1560 = vmatpush1.bf16.msra.mxu0 %v1495
      %1561 = vmatprep.subr.bf16.mxu0 %v1498
      %1562 = vmatpush1.bf16.msra.mxu0 %v1497
      %1563 = vmatprep.subr.bf16.mxu0 %v1500
      %1564 = vmatpush1.bf16.msra.mxu0 %v1499
      %1565 = vmatprep.subr.bf16.mxu0 %v1502
      %1566 = vmatpush1.bf16.msra.mxu0 %v1501
      %1567 = vmatprep.mubr.bf16.mxu0 %v1326
      %1568 = vmatmul.mubr.bf16.gmra.mrb[0].mxu0 %v1325
      %v1569 = vpop.f32.mrb[0].mxu0
      %v1570 = vadd.f32 0.0, %v1569
      %v1571 = vpop.f32.mrb[0].mxu0
      %v1572 = vadd.f32 0.0, %v1571
      %v1573 = vpop.f32.mrb[0].mxu0
      %v1574 = vadd.f32 0.0, %v1573
      %v1575 = vpop.f32.mrb[0].mxu0
      %v1576 = vadd.f32 0.0, %v1575
      %1577 = vmatprep.mubr.bf16.mxu0 %v1328
      %1578 = vmatmul.mubr.bf16.gmra.mrb[0].mxu0 %v1327
      %v1579 = vpop.f32.mrb[0].mxu0
      %v1580 = vadd.f32 0.0, %v1579
      %v1581 = vpop.f32.mrb[0].mxu0
      %v1582 = vadd.f32 0.0, %v1581
      %v1583 = vpop.f32.mrb[0].mxu0
      %v1584 = vadd.f32 0.0, %v1583
      %v1585 = vpop.f32.mrb[0].mxu0
      %v1586 = vadd.f32 0.0, %v1585
      %1587 = vmatprep.mubr.bf16.mxu0 %v1330
      %1588 = vmatmul.mubr.bf16.gmra.mrb[0].mxu0 %v1329
      %v1589 = vpop.f32.mrb[0].mxu0
      %v1590 = vadd.f32 0.0, %v1589
      %v1591 = vpop.f32.mrb[0].mxu0
      %v1592 = vadd.f32 0.0, %v1591
      %v1593 = vpop.f32.mrb[0].mxu0
      %v1594 = vadd.f32 0.0, %v1593
      %v1595 = vpop.f32.mrb[0].mxu0
      %v1596 = vadd.f32 0.0, %v1595
      %1597 = vmatprep.mubr.bf16.mxu0 %v1332
      %1598 = vmatmul.mubr.bf16.gmra.mrb[0].mxu0 %v1331
      %v1599 = vpop.f32.mrb[0].mxu0
      %v1600 = vadd.f32 0.0, %v1599
      %v1601 = vpop.f32.mrb[0].mxu0
      %v1602 = vadd.f32 0.0, %v1601
      %v1603 = vpop.f32.mrb[0].mxu0
      %v1604 = vadd.f32 0.0, %v1603
      %v1605 = vpop.f32.mrb[0].mxu0
      %v1606 = vadd.f32 0.0, %v1605
      %1607 = vmatprep.mubr.bf16.mxu0 %v1334
      %1608 = vmatmul.mubr.bf16.gmra.mrb[0].mxu0 %v1333
      %v1609 = vpop.f32.mrb[0].mxu0
      %v1610 = vadd.f32 0.0, %v1609
      %v1611 = vpop.f32.mrb[0].mxu0
      %v1612 = vadd.f32 0.0, %v1611
      %v1613 = vpop.f32.mrb[0].mxu0
      %v1614 = vadd.f32 0.0, %v1613
      %v1615 = vpop.f32.mrb[0].mxu0
      %v1616 = vadd.f32 0.0, %v1615
      %1617 = vmatprep.mubr.bf16.mxu0 %v1336
      %1618 = vmatmul.mubr.bf16.gmra.mrb[0].mxu0 %v1335
      %v1619 = vpop.f32.mrb[0].mxu0
      %v1620 = vadd.f32 0.0, %v1619
      %v1621 = vpop.f32.mrb[0].mxu0
      %v1622 = vadd.f32 0.0, %v1621
      %v1623 = vpop.f32.mrb[0].mxu0
      %v1624 = vadd.f32 0.0, %v1623
      %v1625 = vpop.f32.mrb[0].mxu0
      %v1626 = vadd.f32 0.0, %v1625
      %1627 = vmatprep.mubr.bf16.mxu0 %v1338
      %1628 = vmatmul.mubr.bf16.gmra.mrb[0].mxu0 %v1337
      %v1629 = vpop.f32.mrb[0].mxu0
      %v1630 = vadd.f32 0.0, %v1629
      %v1631 = vpop.f32.mrb[0].mxu0
      %v1632 = vadd.f32 0.0, %v1631
      %v1633 = vpop.f32.mrb[0].mxu0
      %v1634 = vadd.f32 0.0, %v1633
      %v1635 = vpop.f32.mrb[0].mxu0
      %v1636 = vadd.f32 0.0, %v1635
      %1637 = vmatprep.mubr.bf16.mxu0 %v1340
      %1638 = vmatmul.mubr.bf16.gmra.mrb[0].mxu0 %v1339
      %v1639 = vpop.f32.mrb[0].mxu0
      %v1640 = vadd.f32 0.0, %v1639
      %v1641 = vpop.f32.mrb[0].mxu0
      %v1642 = vadd.f32 0.0, %v1641
      %v1643 = vpop.f32.mrb[0].mxu0
      %v1644 = vadd.f32 0.0, %v1643
      %v1645 = vpop.f32.mrb[0].mxu0
      %v1646 = vadd.f32 0.0, %v1645
      %1647 = vmatprep.mubr.bf16.mxu0 %v1342
      %1648 = vmatmul.mubr.bf16.gmra.mrb[0].mxu0 %v1341
      %v1649 = vpop.f32.mrb[0].mxu0
      %v1650 = vadd.f32 0.0, %v1649
      %v1651 = vpop.f32.mrb[0].mxu0
      %v1652 = vadd.f32 0.0, %v1651
      %v1653 = vpop.f32.mrb[0].mxu0
      %v1654 = vpop.f32.mrb[0].mxu0
      %1655 = vdwg.mxu0
      %1656 = vst [vmem:[%s204] sm:$0xff] %v1570
      %1657 = vst [vmem:[%s204 + $0x8] sm:$0xff] %v1572
      %1658 = vst [vmem:[%s204 + $0x10] sm:$0xff] %v1574
      %1659 = vst [vmem:[%s204 + $0x18] sm:$0xff] %v1576
      %1660 = vst [vmem:[%s204 + $0x20] sm:$0xff] %v1580
      %1661 = vst [vmem:[%s204 + $0x28] sm:$0xff] %v1582
      %1662 = vst [vmem:[%s204 + $0x30] sm:$0xff] %v1584
      %1663 = vst [vmem:[%s204 + $0x38] sm:$0xff] %v1586
      %1664 = vst [vmem:[%s204 + $0x40] sm:$0xff] %v1590
      %1665 = vst [vmem:[%s204 + $0x48] sm:$0xff] %v1592
      %1666 = vst [vmem:[%s204 + $0x50] sm:$0xff] %v1594
      %1667 = vst [vmem:[%s204 + $0x58] sm:$0xff] %v1596
      %1668 = vst [vmem:[%s204 + $0x60] sm:$0xff] %v1600
      %1669 = vst [vmem:[%s204 + $0x68] sm:$0xff] %v1602
      %1670 = vst [vmem:[%s204 + $0x70] sm:$0xff] %v1604
      %1671 = vst [vmem:[%s204 + $0x78] sm:$0xff] %v1606
      %1672 = vst [vmem:[%s204 + $0x80] sm:$0xff] %v1610
      %1673 = vst [vmem:[%s204 + $0x88] sm:$0xff] %v1612
      %1674 = vst [vmem:[%s204 + $0x90] sm:$0xff] %v1614
      %1675 = vst [vmem:[%s204 + $0x98] sm:$0xff] %v1616
      %1676 = vst [vmem:[%s204 + $0xa0] sm:$0xff] %v1620
      %1677 = vst [vmem:[%s204 + $0xa8] sm:$0xff] %v1622
      %1678 = vst [vmem:[%s204 + $0xb0] sm:$0xff] %v1624
      %1679 = vst [vmem:[%s204 + $0xb8] sm:$0xff] %v1626
      %1680 = vst [vmem:[%s204 + $0xc0] sm:$0xff] %v1630
      %1681 = vst [vmem:[%s204 + $0xc8] sm:$0xff] %v1632
      %1682 = vst [vmem:[%s204 + $0xd0] sm:$0xff] %v1634
      %1683 = vst [vmem:[%s204 + $0xd8] sm:$0xff] %v1636
      %1684 = vst [vmem:[%s204 + $0xe0] sm:$0xff] %v1640
      %1685 = vst [vmem:[%s204 + $0xe8] sm:$0xff] %v1642
      %1686 = vst [vmem:[%s204 + $0xf0] sm:$0xff] %v1644
      %1687 = vst [vmem:[%s204 + $0xf8] sm:$0xff] %v1646
      %1688 = vst [vmem:[%s204 + $0x100] sm:$0xff] %v1650
      %1689 = vst [vmem:[%s204 + $0x108] sm:$0xff] %v1652
      %s1690 = smul.u32 17, %s15
      %p1691 = scmp.lt.s32.totalorder %s1690, 33
      %s1692 = scalar_select %p1691, %s1690, 33
      %s1693 = smul.addr %s1692, 2
      %s1694 = smul.addr %s1693, 8
      %s1695 = scalar_lea.vmem %s4, %s1694
      // Predicated region
      $region37: #{ffcse_forward.1} parent=35 // pred_check
        %p1696 = pneg %p122
      $region38: #{ffcse_forward.1} parent=35 // pred_check_branch
        %1698 = sbr.rel (%p1696) target = $region40
      $region39: #{ffcse_forward.1} parent=35 // pred_region
        %s1699 = smul.u32 17, %s15
      $region40: #{ffcse_forward.1} parent=35 // pred_fallthru
        _
    $region36: #{ffcse_forward.1} parent=5 // pred_fallthru
      _
    %p1700 = scmp.le.s32.totalorder 2, %s10
    // Predicated region
    $region41: #{ffcse_forward.1} parent=5 // pred_check
      %p1701 = pneg %p1700
    $region42: #{ffcse_forward.1} parent=5 // pred_check_branch
      %1703 = sbr.rel (%p1701) target = $region44
    $region43: #{ffcse_forward.1} parent=5 // pred_region
      %s1704 = ssub.s32 %s10, 2
      // Predicated region
      $region45: #{ffcse_forward.1} parent=43 // pred_check
        %p1705 = pneg %p128
      $region46: #{ffcse_forward.1} parent=43 // pred_check_branch
        %1707 = sbr.rel (%p1705) target = $region48
      $region47: #{ffcse_forward.1} parent=43 // pred_region
        %s1708 = smul.u32 17, %s16
        %p1709 = scmp.lt.s32.totalorder %s1708, 33
        %s1710 = scalar_select %p1709, %s1708, 33
        %s1711 = smul.addr %s1710, 2
        %s1712 = smul.addr %s1711, 8
        %s1713 = scalar_lea.vmem %s4, %s1712
      $region48: #{ffcse_forward.1} parent=43 // pred_fallthru
        _
    $region44: #{ffcse_forward.1} parent=5 // pred_fallthru
      _
  $region6: #{ffcse_forward.1} parent=0 // loop_footer
    %s14 = sadd.s32 1, %s10
  $region7: #{ffcse_forward.1} parent=0 // loop_footer_branch
    %9 = sbr.rel target = $region3
  $region8: #{ffcse_forward.1} parent=0 // loop_exit
    _

</llo_original>
